<compile_context>
chip_gen: v7x
topology: tpu7x:2x2x1
jax: 0.10.0
libtpu: 0.0.40
codegen_flags: <defaults>
</compile_context>

<pallas_src>
import functools
import math

import jax
import jax.numpy as jnp
from jax.experimental import pallas as pl
from jax.experimental.pallas import tpu as pltpu


# ----------------------------------------------------------------------------
# Nesterov momentum coefficients (compile-time constants, same as the reference)
# ----------------------------------------------------------------------------
def t_k(k):
    """t_k(1) = 1 ; t_k(k) = 0.5 + sqrt(1 + 4 * t_k(k-1)^2) / 2."""
    t = 1.0
    for _ in range(1, k):
        t = 0.5 + math.sqrt(1.0 + 4.0 * t * t) / 2.0
    return t


# ----------------------------------------------------------------------------
# Fused Pallas kernel: full unrolled Nesterov forward pass
# ----------------------------------------------------------------------------
def nesterov_kernel(m_ref, v_ref, wm1_ref, wm2_ref, b1_ref, b2_ref, hist_ref,
                    *, m, d, C, num_blocks, residual, coefs):
    """All blocks of the unrolled network in one kernel invocation.

    m_ref   : VMEM (num_blocks, m_sq, m_sq)  folded gradient operators I - mu_i * A^T A
    v_ref   : VMEM (num_blocks, d, m_sq)     folded offsets mu_i * (y @ A)
    wm1_ref : VMEM (9, C, D)                 conv1 per-tap (channel-weight x border-mask)
    wm2_ref : VMEM (9, C, D)                 conv2 per-tap (channel-weight x border-mask)
    b1_ref  : VMEM (C, 1)                    conv1 bias
    b2_ref  : SMEM (1,)                      conv2 bias
    hist_ref: VMEM (num_blocks, 1, D)        per-block iterates (flat lane-dense layout)
    with D = d * m_sq (batch concatenated along the lane axis).
    """
    m_sq = m * m
    D = d * m_sq
    # Tap offsets, t = (dr+1)*3 + (dc+1) == kh*3 + kw of the torch conv; offs[4] == 0.
    offs = tuple(dr * m + dc for dr in (-1, 0, 1) for dc in (-1, 0, 1))
    b2_s = b2_ref[0]

    def flatten(x2):        # (d, m_sq) -> (1, D): batch elements concatenated along lanes
        return jnp.concatenate([x2[b:b + 1, :] for b in range(d)], axis=1)

    def unflatten(xf):      # (1, D) -> (d, m_sq)
        return jnp.concatenate(
            [xf[:, b * m_sq:(b + 1) * m_sq] for b in range(d)], axis=0)

    x_t = jnp.zeros((1, D), jnp.float32)       # last projector output (flat layout)
    x_nest = jnp.zeros((1, D), jnp.float32)    # Nesterov extrapolated state

    for i in range(num_blocks):
        x_prev = x_t

        # ---- folded gradient step: x_tilde = x_nest @ (I - mu_i G) + mu_i (y @ A) ----
        if i == 0:
            x_tilde2 = v_ref[0]                               # x_nest == 0 exactly
        else:
            x_tilde2 = jnp.dot(unflatten(x_nest), m_ref[i],
                               preferred_element_type=jnp.float32) + v_ref[i]
        x_tilde = flatten(x_tilde2)                           # (1, D) lane-dense

        # ---- conv1 (1 -> C) + ReLU: taps outermost, full-vreg MACs --------------------
        xb = jnp.broadcast_to(x_tilde, (C, D))                # channels on sublane axis
        h = wm1_ref[4] * xb + b1_ref[...]                     # center tap + bias
        for t in range(9):
            if t == 4:
                continue
            rolled = pltpu.roll(xb, shift=(-offs[t]) % D, axis=1)   # XLU lane rotate
            h = h + wm1_ref[t] * rolled                              # mask folded in wm1
        h = jnp.maximum(h, 0.0)

        # ---- conv2 (C -> 1): per-tap full-vreg MACs, one channel reduction at the end -
        acc = wm2_ref[4] * h
        for t in range(9):
            if t == 4:
                continue
            rolled = pltpu.roll(h, shift=(-offs[t]) % D, axis=1)
            acc = acc + wm2_ref[t] * rolled
        out = jnp.sum(acc, axis=0, keepdims=True) + b2_s      # (1, D)

        proj = x_tilde + out if residual else out

        # ---- Nesterov momentum + lane-dense history write ------------------------------
        x_t = proj
        x_nest = proj + coefs[i] * (proj - x_prev)
        hist_ref[i] = x_t


# ----------------------------------------------------------------------------
# Wrapper: one pallas_call for the whole forward pass
# ----------------------------------------------------------------------------
_VMEM = pl.BlockSpec(memory_space=pltpu.MemorySpace.VMEM)
_SMEM = pl.BlockSpec(memory_space=pltpu.MemorySpace.SMEM)


@functools.partial(jax.jit, static_argnames=("residual",))
def nesterov_forward(y, A, mu, w1, b1, w2, b2, residual=False):
    """Returns the history stacked as (num_blocks, d, m*m)."""
    f32 = jnp.float32
    y = y.astype(f32)
    A = A.astype(f32)
    mu = mu.astype(f32)
    d = y.shape[0]
    m_sq = A.shape[1]
    m = int(math.isqrt(m_sq))
    C = w1.shape[-1]
    num_blocks = int(mu.shape[0])
    D = d * m_sq
    coefs = tuple(float((t_k(i + 1) - 1.0) / t_k(i + 2)) for i in range(num_blocks))
    hp = jax.lax.Precision.HIGHEST

    # ---- folded per-block gradient-step operators (single-matmul gradient step) ----
    G = jnp.dot(A.T, A, precision=hp)                         # (m_sq, m_sq) Gram matrix
    yA = jnp.dot(y, A, precision=hp)                          # (d, m_sq)
    M_all = jnp.eye(m_sq, dtype=f32)[None] - mu[:, None, None] * G[None]
    V_all = mu[:, None, None] * yA[None]                      # (num_blocks, d, m_sq)

    # ---- per-tap 'same'-conv border masks in the flat d*m_sq lane layout ----
    pix = jnp.arange(D, dtype=jnp.int32) % m_sq
    row, col = pix // m, pix % m
    masks = []
    for dr in (-1, 0, 1):
        for dc in (-1, 0, 1):
            v = jnp.ones((D,), f32)
            if dr == -1:
                v = v * (row >= 1).astype(f32)
            if dr == 1:
                v = v * (row <= m - 2).astype(f32)
            if dc == -1:
                v = v * (col >= 1).astype(f32)
            if dc == 1:
                v = v * (col <= m - 2).astype(f32)
            masks.append(v)
    masks = jnp.stack(masks)                                  # (9, D)

    # ---- per-tap (channel-weight x mask) planes: one full-vreg MAC per tap ----
    # Weight layout is HWIO: w1 (3,3,1,C), w2 (3,3,C,1); reshape(9, C) gives [tap, ch].
    w1m = w1.reshape(9, C).astype(f32)
    w2m = w2.reshape(9, C).astype(f32)
    wm1 = w1m[:, :, None] * masks[:, None, :]                 # (9, C, D)
    wm2 = w2m[:, :, None] * masks[:, None, :]                 # (9, C, D)

    kernel = functools.partial(nesterov_kernel, m=m, d=d, C=C,
                               num_blocks=num_blocks, residual=residual, coefs=coefs)

    hist = pl.pallas_call(
        kernel,
        out_shape=jax.ShapeDtypeStruct((num_blocks, 1, D), f32),
        in_specs=[_VMEM, _VMEM, _VMEM, _VMEM, _VMEM, _SMEM],
        out_specs=_VMEM,
    )(M_all, V_all, wm1, wm2,
      b1.reshape(C, 1).astype(f32), b2.reshape(-1).astype(f32))

    return hist.reshape(num_blocks, d, m_sq)


# ----------------------------------------------------------------------------
# Pure-JAX reference (mirrors the PyTorch module), used for a correctness check
# ----------------------------------------------------------------------------
def _ref_conv3x3(x_img, w, b):
    """NHWC 3x3 'same' conv (cross-correlation, like torch.nn.Conv2d)."""
    d, m, _, _ = x_img.shape
    hp = jax.lax.Precision.HIGHEST
    xp = jnp.pad(x_img, ((0, 0), (1, 1), (1, 1), (0, 0)))
    out = None
    for kh in range(3):
        for kw in range(3):
            patch = xp[:, kh:kh + m, kw:kw + m, :]
            term = jnp.einsum('bhwc,co->bhwo', patch, w[kh, kw], precision=hp)
            out = term if out is None else out + term
    return out + b.reshape(1, 1, 1, -1)


def reference_forward(y, A, mu_list, params, *, residual=False):
    w1, b1, w2, b2 = params
    d = y.shape[0]
    m_sq = A.shape[1]
    m = int(math.isqrt(m_sq))
    hp = jax.lax.Precision.HIGHEST
    x_t = jnp.zeros((d, m_sq), jnp.float32)
    x_nest = jnp.zeros((d, m_sq), jnp.float32)
    hist = []
    for i, mu in enumerate(mu_list):
        x_prev = x_t
        x_cur = x_nest
        res = y - jnp.dot(x_cur, A.T, precision=hp)
        x_tilde = x_cur + mu * jnp.dot(res, A, precision=hp)
        img = x_tilde.reshape(d, m, m, 1)
        h = jnp.maximum(_ref_conv3x3(img, w1, b1), 0.0)
        o = _ref_conv3x3(h, w2, b2).reshape(d, m_sq)
        proj = x_tilde + o if residual else o
        coef = (t_k(i + 1) - 1.0) / t_k(i + 2)
        x_t = proj
        x_nest = proj + coef * (proj - x_prev)
        hist.append(x_t)
    return jnp.stack(hist)


# ----------------------------------------------------------------------------
# main
# ----------------------------------------------------------------------------
if __name__ == "__main__":
    d = 2            # batch
    m = 16           # image side -> m_sq = 256
    m_sq = m * m
    n = 128          # number of measurements (rows of A)
    C = 8            # hidden channels of the projector
    num_projections = 3
    mu_list = [0.1, 0.05, 0.02]

    key = jax.random.PRNGKey(0)
    kA, ky, k1, k2, k3, k4 = jax.random.split(key, 6)

    A = jax.random.normal(kA, (n, m_sq), jnp.float32) / math.sqrt(m_sq)
    y = jax.random.normal(ky, (d, n), jnp.float32)

    # Projector parameters, identical for every Block (mirrors deepcopy(model) at init).
    # Weight layout is HWIO: (kh, kw, Cin, Cout) — transpose of PyTorch's (Cout, Cin, kh, kw).
    w1 = jax.random.normal(k1, (3, 3, 1, C), jnp.float32) * 0.1
    b1 = jax.random.normal(k2, (C,), jnp.float32) * 0.01
    w2 = jax.random.normal(k3, (3, 3, C, 1), jnp.float32) * 0.1
    b2 = jax.random.normal(k4, (1,), jnp.float32) * 0.01
    mu = jnp.asarray(mu_list, dtype=jnp.float32)

    hist = nesterov_forward(y, A, mu, w1, b1, w2, b2, residual=False)
    hist = jax.block_until_ready(hist)

    # Shape / finiteness checks
    assert hist.shape == (num_projections, d, m_sq)
    assert bool(jnp.isfinite(hist).all())

    # Correctness check vs. pure-JAX reference of the PyTorch forward pass
    ref = reference_forward(y, A, mu_list, (w1, b1, w2, b2), residual=False)
    ref = jax.block_until_ready(ref)
    max_err = float(jnp.max(jnp.abs(hist - ref)))
    assert max_err < 2e-3, f"max abs error vs reference: {max_err}"

    print("KERNEL_OK")
</pallas_src>

<mosaic_0001>
module attributes {stable_mosaic.version = 11 : i64} {
  func.func @nesterov_kernel(%arg0: memref<3x256x256xf32, #tpu.memory_space<vmem>>, %arg1: memref<3x2x256xf32, #tpu.memory_space<vmem>>, %arg2: memref<9x8x512xf32, #tpu.memory_space<vmem>>, %arg3: memref<9x8x512xf32, #tpu.memory_space<vmem>>, %arg4: memref<8x1xf32, #tpu.memory_space<vmem>>, %arg5: memref<1xf32, #tpu.memory_space<smem>>, %arg6: memref<3x1x512xf32, #tpu.memory_space<vmem>>) attributes {dimension_semantics = [], scalar_prefetch = 0 : i64, scratch_operands = 0 : i64, tpu.core_type = #tpu.core_type<tc>} {
    %c0 = arith.constant 0 : index
    %0 = memref.load %arg5[%c0] : memref<1xf32, #tpu.memory_space<smem>>
    %cst = arith.constant 0.000000e+00 : f32
    %1 = vector.broadcast %cst : f32 to vector<1x512xf32>
    %c0_0 = arith.constant 0 : index
    %c0_1 = arith.constant 0 : index
    %c0_2 = arith.constant 0 : index
    %2 = vector.load %arg1[%c0_0, %c0_1, %c0_2] : memref<3x2x256xf32, #tpu.memory_space<vmem>>, vector<1x2x256xf32>
    %3 = vector.shape_cast %2 : vector<1x2x256xf32> to vector<2x256xf32>
    %4 = vector.extract_strided_slice %3 {offsets = [0, 0], sizes = [1, 256], strides = [1, 1]} : vector<2x256xf32> to vector<1x256xf32>
    %5 = vector.extract_strided_slice %3 {offsets = [1, 0], sizes = [1, 256], strides = [1, 1]} : vector<2x256xf32> to vector<1x256xf32>
    %6 = tpu.concatenate %4, %5 in 1 : vector<1x256xf32>, vector<1x256xf32> -> vector<1x512xf32>
    %7 = vector.shape_cast %6 : vector<1x512xf32> to vector<1x512xf32>
    %8 = vector.broadcast %7 : vector<1x512xf32> to vector<8x512xf32>
    %c4 = arith.constant 4 : index
    %c0_3 = arith.constant 0 : index
    %c0_4 = arith.constant 0 : index
    %9 = vector.load %arg2[%c4, %c0_3, %c0_4] : memref<9x8x512xf32, #tpu.memory_space<vmem>>, vector<1x8x512xf32>
    %10 = vector.shape_cast %9 : vector<1x8x512xf32> to vector<8x512xf32>
    %11 = arith.mulf %10, %8 : vector<8x512xf32>
    %c0_5 = arith.constant 0 : index
    %c0_6 = arith.constant 0 : index
    %12 = vector.load %arg4[%c0_5, %c0_6] : memref<8x1xf32, #tpu.memory_space<vmem>>, vector<8x1xf32>
    %13 = vector.broadcast %12 : vector<8x1xf32> to vector<8x512xf32>
    %14 = arith.addf %11, %13 : vector<8x512xf32>
    %c17_i32 = arith.constant 17 : i32
    %15 = tpu.dynamic_rotate %8 by %c17_i32 dim 1 : vector<8x512xf32>, i32 -> vector<8x512xf32>
    %c0_7 = arith.constant 0 : index
    %c0_8 = arith.constant 0 : index
    %c0_9 = arith.constant 0 : index
    %16 = vector.load %arg2[%c0_7, %c0_8, %c0_9] : memref<9x8x512xf32, #tpu.memory_space<vmem>>, vector<1x8x512xf32>
    %17 = vector.shape_cast %16 : vector<1x8x512xf32> to vector<8x512xf32>
    %18 = arith.mulf %17, %15 : vector<8x512xf32>
    %19 = arith.addf %14, %18 : vector<8x512xf32>
    %c16_i32 = arith.constant 16 : i32
    %20 = tpu.dynamic_rotate %8 by %c16_i32 dim 1 : vector<8x512xf32>, i32 -> vector<8x512xf32>
    %c1 = arith.constant 1 : index
    %c0_10 = arith.constant 0 : index
    %c0_11 = arith.constant 0 : index
    %21 = vector.load %arg2[%c1, %c0_10, %c0_11] : memref<9x8x512xf32, #tpu.memory_space<vmem>>, vector<1x8x512xf32>
    %22 = vector.shape_cast %21 : vector<1x8x512xf32> to vector<8x512xf32>
    %23 = arith.mulf %22, %20 : vector<8x512xf32>
    %24 = arith.addf %19, %23 : vector<8x512xf32>
    %c15_i32 = arith.constant 15 : i32
    %25 = tpu.dynamic_rotate %8 by %c15_i32 dim 1 : vector<8x512xf32>, i32 -> vector<8x512xf32>
    %c2 = arith.constant 2 : index
    %c0_12 = arith.constant 0 : index
    %c0_13 = arith.constant 0 : index
    %26 = vector.load %arg2[%c2, %c0_12, %c0_13] : memref<9x8x512xf32, #tpu.memory_space<vmem>>, vector<1x8x512xf32>
    %27 = vector.shape_cast %26 : vector<1x8x512xf32> to vector<8x512xf32>
    %28 = arith.mulf %27, %25 : vector<8x512xf32>
    %29 = arith.addf %24, %28 : vector<8x512xf32>
    %c1_i32 = arith.constant 1 : i32
    %30 = tpu.dynamic_rotate %8 by %c1_i32 dim 1 : vector<8x512xf32>, i32 -> vector<8x512xf32>
    %c3 = arith.constant 3 : index
    %c0_14 = arith.constant 0 : index
    %c0_15 = arith.constant 0 : index
    %31 = vector.load %arg2[%c3, %c0_14, %c0_15] : memref<9x8x512xf32, #tpu.memory_space<vmem>>, vector<1x8x512xf32>
    %32 = vector.shape_cast %31 : vector<1x8x512xf32> to vector<8x512xf32>
    %33 = arith.mulf %32, %30 : vector<8x512xf32>
    %34 = arith.addf %29, %33 : vector<8x512xf32>
    %c511_i32 = arith.constant 511 : i32
    %35 = tpu.dynamic_rotate %8 by %c511_i32 dim 1 : vector<8x512xf32>, i32 -> vector<8x512xf32>
    %c5 = arith.constant 5 : index
    %c0_16 = arith.constant 0 : index
    %c0_17 = arith.constant 0 : index
    %36 = vector.load %arg2[%c5, %c0_16, %c0_17] : memref<9x8x512xf32, #tpu.memory_space<vmem>>, vector<1x8x512xf32>
    %37 = vector.shape_cast %36 : vector<1x8x512xf32> to vector<8x512xf32>
    %38 = arith.mulf %37, %35 : vector<8x512xf32>
    %39 = arith.addf %34, %38 : vector<8x512xf32>
    %c497_i32 = arith.constant 497 : i32
    %40 = tpu.dynamic_rotate %8 by %c497_i32 dim 1 : vector<8x512xf32>, i32 -> vector<8x512xf32>
    %c6 = arith.constant 6 : index
    %c0_18 = arith.constant 0 : index
    %c0_19 = arith.constant 0 : index
    %41 = vector.load %arg2[%c6, %c0_18, %c0_19] : memref<9x8x512xf32, #tpu.memory_space<vmem>>, vector<1x8x512xf32>
    %42 = vector.shape_cast %41 : vector<1x8x512xf32> to vector<8x512xf32>
    %43 = arith.mulf %42, %40 : vector<8x512xf32>
    %44 = arith.addf %39, %43 : vector<8x512xf32>
    %c496_i32 = arith.constant 496 : i32
    %45 = tpu.dynamic_rotate %8 by %c496_i32 dim 1 : vector<8x512xf32>, i32 -> vector<8x512xf32>
    %c7 = arith.constant 7 : index
    %c0_20 = arith.constant 0 : index
    %c0_21 = arith.constant 0 : index
    %46 = vector.load %arg2[%c7, %c0_20, %c0_21] : memref<9x8x512xf32, #tpu.memory_space<vmem>>, vector<1x8x512xf32>
    %47 = vector.shape_cast %46 : vector<1x8x512xf32> to vector<8x512xf32>
    %48 = arith.mulf %47, %45 : vector<8x512xf32>
    %49 = arith.addf %44, %48 : vector<8x512xf32>
    %c495_i32 = arith.constant 495 : i32
    %50 = tpu.dynamic_rotate %8 by %c495_i32 dim 1 : vector<8x512xf32>, i32 -> vector<8x512xf32>
    %c8 = arith.constant 8 : index
    %c0_22 = arith.constant 0 : index
    %c0_23 = arith.constant 0 : index
    %51 = vector.load %arg2[%c8, %c0_22, %c0_23] : memref<9x8x512xf32, #tpu.memory_space<vmem>>, vector<1x8x512xf32>
    %52 = vector.shape_cast %51 : vector<1x8x512xf32> to vector<8x512xf32>
    %53 = arith.mulf %52, %50 : vector<8x512xf32>
    %54 = arith.addf %49, %53 : vector<8x512xf32>
    %cst_24 = arith.constant 0.000000e+00 : f32
    %55 = vector.broadcast %cst_24 : f32 to vector<8x512xf32>
    %56 = arith.maximumf %54, %55 : vector<8x512xf32>
    %c4_25 = arith.constant 4 : index
    %c0_26 = arith.constant 0 : index
    %c0_27 = arith.constant 0 : index
    %57 = vector.load %arg3[%c4_25, %c0_26, %c0_27] : memref<9x8x512xf32, #tpu.memory_space<vmem>>, vector<1x8x512xf32>
    %58 = vector.shape_cast %57 : vector<1x8x512xf32> to vector<8x512xf32>
    %59 = arith.mulf %58, %56 : vector<8x512xf32>
    %c17_i32_28 = arith.constant 17 : i32
    %60 = tpu.dynamic_rotate %56 by %c17_i32_28 dim 1 : vector<8x512xf32>, i32 -> vector<8x512xf32>
    %c0_29 = arith.constant 0 : index
    %c0_30 = arith.constant 0 : index
    %c0_31 = arith.constant 0 : index
    %61 = vector.load %arg3[%c0_29, %c0_30, %c0_31] : memref<9x8x512xf32, #tpu.memory_space<vmem>>, vector<1x8x512xf32>
    %62 = vector.shape_cast %61 : vector<1x8x512xf32> to vector<8x512xf32>
    %63 = arith.mulf %62, %60 : vector<8x512xf32>
    %64 = arith.addf %59, %63 : vector<8x512xf32>
    %c16_i32_32 = arith.constant 16 : i32
    %65 = tpu.dynamic_rotate %56 by %c16_i32_32 dim 1 : vector<8x512xf32>, i32 -> vector<8x512xf32>
    %c1_33 = arith.constant 1 : index
    %c0_34 = arith.constant 0 : index
    %c0_35 = arith.constant 0 : index
    %66 = vector.load %arg3[%c1_33, %c0_34, %c0_35] : memref<9x8x512xf32, #tpu.memory_space<vmem>>, vector<1x8x512xf32>
    %67 = vector.shape_cast %66 : vector<1x8x512xf32> to vector<8x512xf32>
    %68 = arith.mulf %67, %65 : vector<8x512xf32>
    %69 = arith.addf %64, %68 : vector<8x512xf32>
    %c15_i32_36 = arith.constant 15 : i32
    %70 = tpu.dynamic_rotate %56 by %c15_i32_36 dim 1 : vector<8x512xf32>, i32 -> vector<8x512xf32>
    %c2_37 = arith.constant 2 : index
    %c0_38 = arith.constant 0 : index
    %c0_39 = arith.constant 0 : index
    %71 = vector.load %arg3[%c2_37, %c0_38, %c0_39] : memref<9x8x512xf32, #tpu.memory_space<vmem>>, vector<1x8x512xf32>
    %72 = vector.shape_cast %71 : vector<1x8x512xf32> to vector<8x512xf32>
    %73 = arith.mulf %72, %70 : vector<8x512xf32>
    %74 = arith.addf %69, %73 : vector<8x512xf32>
    %c1_i32_40 = arith.constant 1 : i32
    %75 = tpu.dynamic_rotate %56 by %c1_i32_40 dim 1 : vector<8x512xf32>, i32 -> vector<8x512xf32>
    %c3_41 = arith.constant 3 : index
    %c0_42 = arith.constant 0 : index
    %c0_43 = arith.constant 0 : index
    %76 = vector.load %arg3[%c3_41, %c0_42, %c0_43] : memref<9x8x512xf32, #tpu.memory_space<vmem>>, vector<1x8x512xf32>
    %77 = vector.shape_cast %76 : vector<1x8x512xf32> to vector<8x512xf32>
    %78 = arith.mulf %77, %75 : vector<8x512xf32>
    %79 = arith.addf %74, %78 : vector<8x512xf32>
    %c511_i32_44 = arith.constant 511 : i32
    %80 = tpu.dynamic_rotate %56 by %c511_i32_44 dim 1 : vector<8x512xf32>, i32 -> vector<8x512xf32>
    %c5_45 = arith.constant 5 : index
    %c0_46 = arith.constant 0 : index
    %c0_47 = arith.constant 0 : index
    %81 = vector.load %arg3[%c5_45, %c0_46, %c0_47] : memref<9x8x512xf32, #tpu.memory_space<vmem>>, vector<1x8x512xf32>
    %82 = vector.shape_cast %81 : vector<1x8x512xf32> to vector<8x512xf32>
    %83 = arith.mulf %82, %80 : vector<8x512xf32>
    %84 = arith.addf %79, %83 : vector<8x512xf32>
    %c497_i32_48 = arith.constant 497 : i32
    %85 = tpu.dynamic_rotate %56 by %c497_i32_48 dim 1 : vector<8x512xf32>, i32 -> vector<8x512xf32>
    %c6_49 = arith.constant 6 : index
    %c0_50 = arith.constant 0 : index
    %c0_51 = arith.constant 0 : index
    %86 = vector.load %arg3[%c6_49, %c0_50, %c0_51] : memref<9x8x512xf32, #tpu.memory_space<vmem>>, vector<1x8x512xf32>
    %87 = vector.shape_cast %86 : vector<1x8x512xf32> to vector<8x512xf32>
    %88 = arith.mulf %87, %85 : vector<8x512xf32>
    %89 = arith.addf %84, %88 : vector<8x512xf32>
    %c496_i32_52 = arith.constant 496 : i32
    %90 = tpu.dynamic_rotate %56 by %c496_i32_52 dim 1 : vector<8x512xf32>, i32 -> vector<8x512xf32>
    %c7_53 = arith.constant 7 : index
    %c0_54 = arith.constant 0 : index
    %c0_55 = arith.constant 0 : index
    %91 = vector.load %arg3[%c7_53, %c0_54, %c0_55] : memref<9x8x512xf32, #tpu.memory_space<vmem>>, vector<1x8x512xf32>
    %92 = vector.shape_cast %91 : vector<1x8x512xf32> to vector<8x512xf32>
    %93 = arith.mulf %92, %90 : vector<8x512xf32>
    %94 = arith.addf %89, %93 : vector<8x512xf32>
    %c495_i32_56 = arith.constant 495 : i32
    %95 = tpu.dynamic_rotate %56 by %c495_i32_56 dim 1 : vector<8x512xf32>, i32 -> vector<8x512xf32>
    %c8_57 = arith.constant 8 : index
    %c0_58 = arith.constant 0 : index
    %c0_59 = arith.constant 0 : index
    %96 = vector.load %arg3[%c8_57, %c0_58, %c0_59] : memref<9x8x512xf32, #tpu.memory_space<vmem>>, vector<1x8x512xf32>
    %97 = vector.shape_cast %96 : vector<1x8x512xf32> to vector<8x512xf32>
    %98 = arith.mulf %97, %95 : vector<8x512xf32>
    %99 = arith.addf %94, %98 : vector<8x512xf32>
    %cst_60 = arith.constant dense<0.000000e+00> : vector<512xf32>
    %100 = vector.multi_reduction <add>, %99, %cst_60 [0] : vector<8x512xf32> to vector<512xf32>
    %101 = vector.shape_cast %100 : vector<512xf32> to vector<1x512xf32>
    %102 = vector.broadcast %0 : f32 to vector<1x512xf32>
    %103 = arith.addf %101, %102 : vector<1x512xf32>
    %104 = arith.subf %103, %1 : vector<1x512xf32>
    %cst_61 = arith.constant 0.000000e+00 : f32
    %105 = vector.broadcast %cst_61 : f32 to vector<1x512xf32>
    %106 = arith.mulf %105, %104 : vector<1x512xf32>
    %107 = arith.addf %103, %106 : vector<1x512xf32>
    %c0_62 = arith.constant 0 : index
    %c0_63 = arith.constant 0 : index
    %c0_64 = arith.constant 0 : index
    %108 = vector.load %arg6[%c0_62, %c0_63, %c0_64] : memref<3x1x512xf32, #tpu.memory_space<vmem>>, vector<1x1x512xf32>
    %109 = vector.shape_cast %108 : vector<1x1x512xf32> to vector<1x512xf32>
    %110 = vector.shape_cast %103 : vector<1x512xf32> to vector<1x1x512xf32>
    tpu.vector_store %arg6[%c0_62, %c0_63, %c0_64], %110 {strides = array<i32>} : memref<3x1x512xf32, #tpu.memory_space<vmem>>, vector<1x1x512xf32>,
    %111 = vector.extract_strided_slice %107 {offsets = [0, 0], sizes = [1, 256], strides = [1, 1]} : vector<1x512xf32> to vector<1x256xf32>
    %112 = vector.extract_strided_slice %107 {offsets = [0, 256], sizes = [1, 256], strides = [1, 1]} : vector<1x512xf32> to vector<1x256xf32>
    %113 = tpu.concatenate %111, %112 in 0 : vector<1x256xf32>, vector<1x256xf32> -> vector<2x256xf32>
    %c1_65 = arith.constant 1 : index
    %c0_66 = arith.constant 0 : index
    %c0_67 = arith.constant 0 : index
    %114 = vector.load %arg0[%c1_65, %c0_66, %c0_67] : memref<3x256x256xf32, #tpu.memory_space<vmem>>, vector<1x256x256xf32>
    %115 = vector.shape_cast %114 : vector<1x256x256xf32> to vector<256x256xf32>
    %cst_68 = arith.constant dense<0.000000e+00> : vector<2x256xf32>
    %116 = tpu.matmul %113, %115, %cst_68 {dimension_numbers = #tpu.dot_dimension_numbers<[1], [0], [0], [1], [0, 0, 1, 1], [], []>} : vector<2x256xf32>, vector<256x256xf32>, vector<2x256xf32> -> vector<2x256xf32>
    %c1_69 = arith.constant 1 : index
    %c0_70 = arith.constant 0 : index
    %c0_71 = arith.constant 0 : index
    %117 = vector.load %arg1[%c1_69, %c0_70, %c0_71] : memref<3x2x256xf32, #tpu.memory_space<vmem>>, vector<1x2x256xf32>
    %118 = vector.shape_cast %117 : vector<1x2x256xf32> to vector<2x256xf32>
    %119 = arith.addf %116, %118 : vector<2x256xf32>
    %120 = vector.extract_strided_slice %119 {offsets = [0, 0], sizes = [1, 256], strides = [1, 1]} : vector<2x256xf32> to vector<1x256xf32>
    %121 = vector.extract_strided_slice %119 {offsets = [1, 0], sizes = [1, 256], strides = [1, 1]} : vector<2x256xf32> to vector<1x256xf32>
    %122 = tpu.concatenate %120, %121 in 1 : vector<1x256xf32>, vector<1x256xf32> -> vector<1x512xf32>
    %123 = vector.shape_cast %122 : vector<1x512xf32> to vector<1x512xf32>
    %124 = vector.broadcast %123 : vector<1x512xf32> to vector<8x512xf32>
    %c4_72 = arith.constant 4 : index
    %c0_73 = arith.constant 0 : index
    %c0_74 = arith.constant 0 : index
    %125 = vector.load %arg2[%c4_72, %c0_73, %c0_74] : memref<9x8x512xf32, #tpu.memory_space<vmem>>, vector<1x8x512xf32>
    %126 = vector.shape_cast %125 : vector<1x8x512xf32> to vector<8x512xf32>
    %127 = arith.mulf %126, %124 : vector<8x512xf32>
    %c0_75 = arith.constant 0 : index
    %c0_76 = arith.constant 0 : index
    %128 = vector.load %arg4[%c0_75, %c0_76] : memref<8x1xf32, #tpu.memory_space<vmem>>, vector<8x1xf32>
    %129 = vector.broadcast %128 : vector<8x1xf32> to vector<8x512xf32>
    %130 = arith.addf %127, %129 : vector<8x512xf32>
    %c17_i32_77 = arith.constant 17 : i32
    %131 = tpu.dynamic_rotate %124 by %c17_i32_77 dim 1 : vector<8x512xf32>, i32 -> vector<8x512xf32>
    %c0_78 = arith.constant 0 : index
    %c0_79 = arith.constant 0 : index
    %c0_80 = arith.constant 0 : index
    %132 = vector.load %arg2[%c0_78, %c0_79, %c0_80] : memref<9x8x512xf32, #tpu.memory_space<vmem>>, vector<1x8x512xf32>
    %133 = vector.shape_cast %132 : vector<1x8x512xf32> to vector<8x512xf32>
    %134 = arith.mulf %133, %131 : vector<8x512xf32>
    %135 = arith.addf %130, %134 : vector<8x512xf32>
    %c16_i32_81 = arith.constant 16 : i32
    %136 = tpu.dynamic_rotate %124 by %c16_i32_81 dim 1 : vector<8x512xf32>, i32 -> vector<8x512xf32>
    %c1_82 = arith.constant 1 : index
    %c0_83 = arith.constant 0 : index
    %c0_84 = arith.constant 0 : index
    %137 = vector.load %arg2[%c1_82, %c0_83, %c0_84] : memref<9x8x512xf32, #tpu.memory_space<vmem>>, vector<1x8x512xf32>
    %138 = vector.shape_cast %137 : vector<1x8x512xf32> to vector<8x512xf32>
    %139 = arith.mulf %138, %136 : vector<8x512xf32>
    %140 = arith.addf %135, %139 : vector<8x512xf32>
    %c15_i32_85 = arith.constant 15 : i32
    %141 = tpu.dynamic_rotate %124 by %c15_i32_85 dim 1 : vector<8x512xf32>, i32 -> vector<8x512xf32>
    %c2_86 = arith.constant 2 : index
    %c0_87 = arith.constant 0 : index
    %c0_88 = arith.constant 0 : index
    %142 = vector.load %arg2[%c2_86, %c0_87, %c0_88] : memref<9x8x512xf32, #tpu.memory_space<vmem>>, vector<1x8x512xf32>
    %143 = vector.shape_cast %142 : vector<1x8x512xf32> to vector<8x512xf32>
    %144 = arith.mulf %143, %141 : vector<8x512xf32>
    %145 = arith.addf %140, %144 : vector<8x512xf32>
    %c1_i32_89 = arith.constant 1 : i32
    %146 = tpu.dynamic_rotate %124 by %c1_i32_89 dim 1 : vector<8x512xf32>, i32 -> vector<8x512xf32>
    %c3_90 = arith.constant 3 : index
    %c0_91 = arith.constant 0 : index
    %c0_92 = arith.constant 0 : index
    %147 = vector.load %arg2[%c3_90, %c0_91, %c0_92] : memref<9x8x512xf32, #tpu.memory_space<vmem>>, vector<1x8x512xf32>
    %148 = vector.shape_cast %147 : vector<1x8x512xf32> to vector<8x512xf32>
    %149 = arith.mulf %148, %146 : vector<8x512xf32>
    %150 = arith.addf %145, %149 : vector<8x512xf32>
    %c511_i32_93 = arith.constant 511 : i32
    %151 = tpu.dynamic_rotate %124 by %c511_i32_93 dim 1 : vector<8x512xf32>, i32 -> vector<8x512xf32>
    %c5_94 = arith.constant 5 : index
    %c0_95 = arith.constant 0 : index
    %c0_96 = arith.constant 0 : index
    %152 = vector.load %arg2[%c5_94, %c0_95, %c0_96] : memref<9x8x512xf32, #tpu.memory_space<vmem>>, vector<1x8x512xf32>
    %153 = vector.shape_cast %152 : vector<1x8x512xf32> to vector<8x512xf32>
    %154 = arith.mulf %153, %151 : vector<8x512xf32>
    %155 = arith.addf %150, %154 : vector<8x512xf32>
    %c497_i32_97 = arith.constant 497 : i32
    %156 = tpu.dynamic_rotate %124 by %c497_i32_97 dim 1 : vector<8x512xf32>, i32 -> vector<8x512xf32>
    %c6_98 = arith.constant 6 : index
    %c0_99 = arith.constant 0 : index
    %c0_100 = arith.constant 0 : index
    %157 = vector.load %arg2[%c6_98, %c0_99, %c0_100] : memref<9x8x512xf32, #tpu.memory_space<vmem>>, vector<1x8x512xf32>
    %158 = vector.shape_cast %157 : vector<1x8x512xf32> to vector<8x512xf32>
    %159 = arith.mulf %158, %156 : vector<8x512xf32>
    %160 = arith.addf %155, %159 : vector<8x512xf32>
    %c496_i32_101 = arith.constant 496 : i32
    %161 = tpu.dynamic_rotate %124 by %c496_i32_101 dim 1 : vector<8x512xf32>, i32 -> vector<8x512xf32>
    %c7_102 = arith.constant 7 : index
    %c0_103 = arith.constant 0 : index
    %c0_104 = arith.constant 0 : index
    %162 = vector.load %arg2[%c7_102, %c0_103, %c0_104] : memref<9x8x512xf32, #tpu.memory_space<vmem>>, vector<1x8x512xf32>
    %163 = vector.shape_cast %162 : vector<1x8x512xf32> to vector<8x512xf32>
    %164 = arith.mulf %163, %161 : vector<8x512xf32>
    %165 = arith.addf %160, %164 : vector<8x512xf32>
    %c495_i32_105 = arith.constant 495 : i32
    %166 = tpu.dynamic_rotate %124 by %c495_i32_105 dim 1 : vector<8x512xf32>, i32 -> vector<8x512xf32>
    %c8_106 = arith.constant 8 : index
    %c0_107 = arith.constant 0 : index
    %c0_108 = arith.constant 0 : index
    %167 = vector.load %arg2[%c8_106, %c0_107, %c0_108] : memref<9x8x512xf32, #tpu.memory_space<vmem>>, vector<1x8x512xf32>
    %168 = vector.shape_cast %167 : vector<1x8x512xf32> to vector<8x512xf32>
    %169 = arith.mulf %168, %166 : vector<8x512xf32>
    %170 = arith.addf %165, %169 : vector<8x512xf32>
    %cst_109 = arith.constant 0.000000e+00 : f32
    %171 = vector.broadcast %cst_109 : f32 to vector<8x512xf32>
    %172 = arith.maximumf %170, %171 : vector<8x512xf32>
    %c4_110 = arith.constant 4 : index
    %c0_111 = arith.constant 0 : index
    %c0_112 = arith.constant 0 : index
    %173 = vector.load %arg3[%c4_110, %c0_111, %c0_112] : memref<9x8x512xf32, #tpu.memory_space<vmem>>, vector<1x8x512xf32>
    %174 = vector.shape_cast %173 : vector<1x8x512xf32> to vector<8x512xf32>
    %175 = arith.mulf %174, %172 : vector<8x512xf32>
    %c17_i32_113 = arith.constant 17 : i32
    %176 = tpu.dynamic_rotate %172 by %c17_i32_113 dim 1 : vector<8x512xf32>, i32 -> vector<8x512xf32>
    %c0_114 = arith.constant 0 : index
    %c0_115 = arith.constant 0 : index
    %c0_116 = arith.constant 0 : index
    %177 = vector.load %arg3[%c0_114, %c0_115, %c0_116] : memref<9x8x512xf32, #tpu.memory_space<vmem>>, vector<1x8x512xf32>
    %178 = vector.shape_cast %177 : vector<1x8x512xf32> to vector<8x512xf32>
    %179 = arith.mulf %178, %176 : vector<8x512xf32>
    %180 = arith.addf %175, %179 : vector<8x512xf32>
    %c16_i32_117 = arith.constant 16 : i32
    %181 = tpu.dynamic_rotate %172 by %c16_i32_117 dim 1 : vector<8x512xf32>, i32 -> vector<8x512xf32>
    %c1_118 = arith.constant 1 : index
    %c0_119 = arith.constant 0 : index
    %c0_120 = arith.constant 0 : index
    %182 = vector.load %arg3[%c1_118, %c0_119, %c0_120] : memref<9x8x512xf32, #tpu.memory_space<vmem>>, vector<1x8x512xf32>
    %183 = vector.shape_cast %182 : vector<1x8x512xf32> to vector<8x512xf32>
    %184 = arith.mulf %183, %181 : vector<8x512xf32>
    %185 = arith.addf %180, %184 : vector<8x512xf32>
    %c15_i32_121 = arith.constant 15 : i32
    %186 = tpu.dynamic_rotate %172 by %c15_i32_121 dim 1 : vector<8x512xf32>, i32 -> vector<8x512xf32>
    %c2_122 = arith.constant 2 : index
    %c0_123 = arith.constant 0 : index
    %c0_124 = arith.constant 0 : index
    %187 = vector.load %arg3[%c2_122, %c0_123, %c0_124] : memref<9x8x512xf32, #tpu.memory_space<vmem>>, vector<1x8x512xf32>
    %188 = vector.shape_cast %187 : vector<1x8x512xf32> to vector<8x512xf32>
    %189 = arith.mulf %188, %186 : vector<8x512xf32>
    %190 = arith.addf %185, %189 : vector<8x512xf32>
    %c1_i32_125 = arith.constant 1 : i32
    %191 = tpu.dynamic_rotate %172 by %c1_i32_125 dim 1 : vector<8x512xf32>, i32 -> vector<8x512xf32>
    %c3_126 = arith.constant 3 : index
    %c0_127 = arith.constant 0 : index
    %c0_128 = arith.constant 0 : index
    %192 = vector.load %arg3[%c3_126, %c0_127, %c0_128] : memref<9x8x512xf32, #tpu.memory_space<vmem>>, vector<1x8x512xf32>
    %193 = vector.shape_cast %192 : vector<1x8x512xf32> to vector<8x512xf32>
    %194 = arith.mulf %193, %191 : vector<8x512xf32>
    %195 = arith.addf %190, %194 : vector<8x512xf32>
    %c511_i32_129 = arith.constant 511 : i32
    %196 = tpu.dynamic_rotate %172 by %c511_i32_129 dim 1 : vector<8x512xf32>, i32 -> vector<8x512xf32>
    %c5_130 = arith.constant 5 : index
    %c0_131 = arith.constant 0 : index
    %c0_132 = arith.constant 0 : index
    %197 = vector.load %arg3[%c5_130, %c0_131, %c0_132] : memref<9x8x512xf32, #tpu.memory_space<vmem>>, vector<1x8x512xf32>
    %198 = vector.shape_cast %197 : vector<1x8x512xf32> to vector<8x512xf32>
    %199 = arith.mulf %198, %196 : vector<8x512xf32>
    %200 = arith.addf %195, %199 : vector<8x512xf32>
    %c497_i32_133 = arith.constant 497 : i32
    %201 = tpu.dynamic_rotate %172 by %c497_i32_133 dim 1 : vector<8x512xf32>, i32 -> vector<8x512xf32>
    %c6_134 = arith.constant 6 : index
    %c0_135 = arith.constant 0 : index
    %c0_136 = arith.constant 0 : index
    %202 = vector.load %arg3[%c6_134, %c0_135, %c0_136] : memref<9x8x512xf32, #tpu.memory_space<vmem>>, vector<1x8x512xf32>
    %203 = vector.shape_cast %202 : vector<1x8x512xf32> to vector<8x512xf32>
    %204 = arith.mulf %203, %201 : vector<8x512xf32>
    %205 = arith.addf %200, %204 : vector<8x512xf32>
    %c496_i32_137 = arith.constant 496 : i32
    %206 = tpu.dynamic_rotate %172 by %c496_i32_137 dim 1 : vector<8x512xf32>, i32 -> vector<8x512xf32>
    %c7_138 = arith.constant 7 : index
    %c0_139 = arith.constant 0 : index
    %c0_140 = arith.constant 0 : index
    %207 = vector.load %arg3[%c7_138, %c0_139, %c0_140] : memref<9x8x512xf32, #tpu.memory_space<vmem>>, vector<1x8x512xf32>
    %208 = vector.shape_cast %207 : vector<1x8x512xf32> to vector<8x512xf32>
    %209 = arith.mulf %208, %206 : vector<8x512xf32>
    %210 = arith.addf %205, %209 : vector<8x512xf32>
    %c495_i32_141 = arith.constant 495 : i32
    %211 = tpu.dynamic_rotate %172 by %c495_i32_141 dim 1 : vector<8x512xf32>, i32 -> vector<8x512xf32>
    %c8_142 = arith.constant 8 : index
    %c0_143 = arith.constant 0 : index
    %c0_144 = arith.constant 0 : index
    %212 = vector.load %arg3[%c8_142, %c0_143, %c0_144] : memref<9x8x512xf32, #tpu.memory_space<vmem>>, vector<1x8x512xf32>
    %213 = vector.shape_cast %212 : vector<1x8x512xf32> to vector<8x512xf32>
    %214 = arith.mulf %213, %211 : vector<8x512xf32>
    %215 = arith.addf %210, %214 : vector<8x512xf32>
    %cst_145 = arith.constant dense<0.000000e+00> : vector<512xf32>
    %216 = vector.multi_reduction <add>, %215, %cst_145 [0] : vector<8x512xf32> to vector<512xf32>
    %217 = vector.shape_cast %216 : vector<512xf32> to vector<1x512xf32>
    %218 = vector.broadcast %0 : f32 to vector<1x512xf32>
    %219 = arith.addf %217, %218 : vector<1x512xf32>
    %220 = arith.subf %219, %103 : vector<1x512xf32>
    %cst_146 = arith.constant 0.28175351 : f32
    %221 = vector.broadcast %cst_146 : f32 to vector<1x512xf32>
    %222 = arith.mulf %221, %220 : vector<1x512xf32>
    %223 = arith.addf %219, %222 : vector<1x512xf32>
    %c1_147 = arith.constant 1 : index
    %c0_148 = arith.constant 0 : index
    %c0_149 = arith.constant 0 : index
    %224 = vector.load %arg6[%c1_147, %c0_148, %c0_149] : memref<3x1x512xf32, #tpu.memory_space<vmem>>, vector<1x1x512xf32>
    %225 = vector.shape_cast %224 : vector<1x1x512xf32> to vector<1x512xf32>
    %226 = vector.shape_cast %219 : vector<1x512xf32> to vector<1x1x512xf32>
    tpu.vector_store %arg6[%c1_147, %c0_148, %c0_149], %226 {strides = array<i32>} : memref<3x1x512xf32, #tpu.memory_space<vmem>>, vector<1x1x512xf32>,
    %227 = vector.extract_strided_slice %223 {offsets = [0, 0], sizes = [1, 256], strides = [1, 1]} : vector<1x512xf32> to vector<1x256xf32>
    %228 = vector.extract_strided_slice %223 {offsets = [0, 256], sizes = [1, 256], strides = [1, 1]} : vector<1x512xf32> to vector<1x256xf32>
    %229 = tpu.concatenate %227, %228 in 0 : vector<1x256xf32>, vector<1x256xf32> -> vector<2x256xf32>
    %c2_150 = arith.constant 2 : index
    %c0_151 = arith.constant 0 : index
    %c0_152 = arith.constant 0 : index
    %230 = vector.load %arg0[%c2_150, %c0_151, %c0_152] : memref<3x256x256xf32, #tpu.memory_space<vmem>>, vector<1x256x256xf32>
    %231 = vector.shape_cast %230 : vector<1x256x256xf32> to vector<256x256xf32>
    %cst_153 = arith.constant dense<0.000000e+00> : vector<2x256xf32>
    %232 = tpu.matmul %229, %231, %cst_153 {dimension_numbers = #tpu.dot_dimension_numbers<[1], [0], [0], [1], [0, 0, 1, 1], [], []>} : vector<2x256xf32>, vector<256x256xf32>, vector<2x256xf32> -> vector<2x256xf32>
    %c2_154 = arith.constant 2 : index
    %c0_155 = arith.constant 0 : index
    %c0_156 = arith.constant 0 : index
    %233 = vector.load %arg1[%c2_154, %c0_155, %c0_156] : memref<3x2x256xf32, #tpu.memory_space<vmem>>, vector<1x2x256xf32>
    %234 = vector.shape_cast %233 : vector<1x2x256xf32> to vector<2x256xf32>
    %235 = arith.addf %232, %234 : vector<2x256xf32>
    %236 = vector.extract_strided_slice %235 {offsets = [0, 0], sizes = [1, 256], strides = [1, 1]} : vector<2x256xf32> to vector<1x256xf32>
    %237 = vector.extract_strided_slice %235 {offsets = [1, 0], sizes = [1, 256], strides = [1, 1]} : vector<2x256xf32> to vector<1x256xf32>
    %238 = tpu.concatenate %236, %237 in 1 : vector<1x256xf32>, vector<1x256xf32> -> vector<1x512xf32>
    %239 = vector.shape_cast %238 : vector<1x512xf32> to vector<1x512xf32>
    %240 = vector.broadcast %239 : vector<1x512xf32> to vector<8x512xf32>
    %c4_157 = arith.constant 4 : index
    %c0_158 = arith.constant 0 : index
    %c0_159 = arith.constant 0 : index
    %241 = vector.load %arg2[%c4_157, %c0_158, %c0_159] : memref<9x8x512xf32, #tpu.memory_space<vmem>>, vector<1x8x512xf32>
    %242 = vector.shape_cast %241 : vector<1x8x512xf32> to vector<8x512xf32>
    %243 = arith.mulf %242, %240 : vector<8x512xf32>
    %c0_160 = arith.constant 0 : index
    %c0_161 = arith.constant 0 : index
    %244 = vector.load %arg4[%c0_160, %c0_161] : memref<8x1xf32, #tpu.memory_space<vmem>>, vector<8x1xf32>
    %245 = vector.broadcast %244 : vector<8x1xf32> to vector<8x512xf32>
    %246 = arith.addf %243, %245 : vector<8x512xf32>
    %c17_i32_162 = arith.constant 17 : i32
    %247 = tpu.dynamic_rotate %240 by %c17_i32_162 dim 1 : vector<8x512xf32>, i32 -> vector<8x512xf32>
    %c0_163 = arith.constant 0 : index
    %c0_164 = arith.constant 0 : index
    %c0_165 = arith.constant 0 : index
    %248 = vector.load %arg2[%c0_163, %c0_164, %c0_165] : memref<9x8x512xf32, #tpu.memory_space<vmem>>, vector<1x8x512xf32>
    %249 = vector.shape_cast %248 : vector<1x8x512xf32> to vector<8x512xf32>
    %250 = arith.mulf %249, %247 : vector<8x512xf32>
    %251 = arith.addf %246, %250 : vector<8x512xf32>
    %c16_i32_166 = arith.constant 16 : i32
    %252 = tpu.dynamic_rotate %240 by %c16_i32_166 dim 1 : vector<8x512xf32>, i32 -> vector<8x512xf32>
    %c1_167 = arith.constant 1 : index
    %c0_168 = arith.constant 0 : index
    %c0_169 = arith.constant 0 : index
    %253 = vector.load %arg2[%c1_167, %c0_168, %c0_169] : memref<9x8x512xf32, #tpu.memory_space<vmem>>, vector<1x8x512xf32>
    %254 = vector.shape_cast %253 : vector<1x8x512xf32> to vector<8x512xf32>
    %255 = arith.mulf %254, %252 : vector<8x512xf32>
    %256 = arith.addf %251, %255 : vector<8x512xf32>
    %c15_i32_170 = arith.constant 15 : i32
    %257 = tpu.dynamic_rotate %240 by %c15_i32_170 dim 1 : vector<8x512xf32>, i32 -> vector<8x512xf32>
    %c2_171 = arith.constant 2 : index
    %c0_172 = arith.constant 0 : index
    %c0_173 = arith.constant 0 : index
    %258 = vector.load %arg2[%c2_171, %c0_172, %c0_173] : memref<9x8x512xf32, #tpu.memory_space<vmem>>, vector<1x8x512xf32>
    %259 = vector.shape_cast %258 : vector<1x8x512xf32> to vector<8x512xf32>
    %260 = arith.mulf %259, %257 : vector<8x512xf32>
    %261 = arith.addf %256, %260 : vector<8x512xf32>
    %c1_i32_174 = arith.constant 1 : i32
    %262 = tpu.dynamic_rotate %240 by %c1_i32_174 dim 1 : vector<8x512xf32>, i32 -> vector<8x512xf32>
    %c3_175 = arith.constant 3 : index
    %c0_176 = arith.constant 0 : index
    %c0_177 = arith.constant 0 : index
    %263 = vector.load %arg2[%c3_175, %c0_176, %c0_177] : memref<9x8x512xf32, #tpu.memory_space<vmem>>, vector<1x8x512xf32>
    %264 = vector.shape_cast %263 : vector<1x8x512xf32> to vector<8x512xf32>
    %265 = arith.mulf %264, %262 : vector<8x512xf32>
    %266 = arith.addf %261, %265 : vector<8x512xf32>
    %c511_i32_178 = arith.constant 511 : i32
    %267 = tpu.dynamic_rotate %240 by %c511_i32_178 dim 1 : vector<8x512xf32>, i32 -> vector<8x512xf32>
    %c5_179 = arith.constant 5 : index
    %c0_180 = arith.constant 0 : index
    %c0_181 = arith.constant 0 : index
    %268 = vector.load %arg2[%c5_179, %c0_180, %c0_181] : memref<9x8x512xf32, #tpu.memory_space<vmem>>, vector<1x8x512xf32>
    %269 = vector.shape_cast %268 : vector<1x8x512xf32> to vector<8x512xf32>
    %270 = arith.mulf %269, %267 : vector<8x512xf32>
    %271 = arith.addf %266, %270 : vector<8x512xf32>
    %c497_i32_182 = arith.constant 497 : i32
    %272 = tpu.dynamic_rotate %240 by %c497_i32_182 dim 1 : vector<8x512xf32>, i32 -> vector<8x512xf32>
    %c6_183 = arith.constant 6 : index
    %c0_184 = arith.constant 0 : index
    %c0_185 = arith.constant 0 : index
    %273 = vector.load %arg2[%c6_183, %c0_184, %c0_185] : memref<9x8x512xf32, #tpu.memory_space<vmem>>, vector<1x8x512xf32>
    %274 = vector.shape_cast %273 : vector<1x8x512xf32> to vector<8x512xf32>
    %275 = arith.mulf %274, %272 : vector<8x512xf32>
    %276 = arith.addf %271, %275 : vector<8x512xf32>
    %c496_i32_186 = arith.constant 496 : i32
    %277 = tpu.dynamic_rotate %240 by %c496_i32_186 dim 1 : vector<8x512xf32>, i32 -> vector<8x512xf32>
    %c7_187 = arith.constant 7 : index
    %c0_188 = arith.constant 0 : index
    %c0_189 = arith.constant 0 : index
    %278 = vector.load %arg2[%c7_187, %c0_188, %c0_189] : memref<9x8x512xf32, #tpu.memory_space<vmem>>, vector<1x8x512xf32>
    %279 = vector.shape_cast %278 : vector<1x8x512xf32> to vector<8x512xf32>
    %280 = arith.mulf %279, %277 : vector<8x512xf32>
    %281 = arith.addf %276, %280 : vector<8x512xf32>
    %c495_i32_190 = arith.constant 495 : i32
    %282 = tpu.dynamic_rotate %240 by %c495_i32_190 dim 1 : vector<8x512xf32>, i32 -> vector<8x512xf32>
    %c8_191 = arith.constant 8 : index
    %c0_192 = arith.constant 0 : index
    %c0_193 = arith.constant 0 : index
    %283 = vector.load %arg2[%c8_191, %c0_192, %c0_193] : memref<9x8x512xf32, #tpu.memory_space<vmem>>, vector<1x8x512xf32>
    %284 = vector.shape_cast %283 : vector<1x8x512xf32> to vector<8x512xf32>
    %285 = arith.mulf %284, %282 : vector<8x512xf32>
    %286 = arith.addf %281, %285 : vector<8x512xf32>
    %cst_194 = arith.constant 0.000000e+00 : f32
    %287 = vector.broadcast %cst_194 : f32 to vector<8x512xf32>
    %288 = arith.maximumf %286, %287 : vector<8x512xf32>
    %c4_195 = arith.constant 4 : index
    %c0_196 = arith.constant 0 : index
    %c0_197 = arith.constant 0 : index
    %289 = vector.load %arg3[%c4_195, %c0_196, %c0_197] : memref<9x8x512xf32, #tpu.memory_space<vmem>>, vector<1x8x512xf32>
    %290 = vector.shape_cast %289 : vector<1x8x512xf32> to vector<8x512xf32>
    %291 = arith.mulf %290, %288 : vector<8x512xf32>
    %c17_i32_198 = arith.constant 17 : i32
    %292 = tpu.dynamic_rotate %288 by %c17_i32_198 dim 1 : vector<8x512xf32>, i32 -> vector<8x512xf32>
    %c0_199 = arith.constant 0 : index
    %c0_200 = arith.constant 0 : index
    %c0_201 = arith.constant 0 : index
    %293 = vector.load %arg3[%c0_199, %c0_200, %c0_201] : memref<9x8x512xf32, #tpu.memory_space<vmem>>, vector<1x8x512xf32>
    %294 = vector.shape_cast %293 : vector<1x8x512xf32> to vector<8x512xf32>
    %295 = arith.mulf %294, %292 : vector<8x512xf32>
    %296 = arith.addf %291, %295 : vector<8x512xf32>
    %c16_i32_202 = arith.constant 16 : i32
    %297 = tpu.dynamic_rotate %288 by %c16_i32_202 dim 1 : vector<8x512xf32>, i32 -> vector<8x512xf32>
    %c1_203 = arith.constant 1 : index
    %c0_204 = arith.constant 0 : index
    %c0_205 = arith.constant 0 : index
    %298 = vector.load %arg3[%c1_203, %c0_204, %c0_205] : memref<9x8x512xf32, #tpu.memory_space<vmem>>, vector<1x8x512xf32>
    %299 = vector.shape_cast %298 : vector<1x8x512xf32> to vector<8x512xf32>
    %300 = arith.mulf %299, %297 : vector<8x512xf32>
    %301 = arith.addf %296, %300 : vector<8x512xf32>
    %c15_i32_206 = arith.constant 15 : i32
    %302 = tpu.dynamic_rotate %288 by %c15_i32_206 dim 1 : vector<8x512xf32>, i32 -> vector<8x512xf32>
    %c2_207 = arith.constant 2 : index
    %c0_208 = arith.constant 0 : index
    %c0_209 = arith.constant 0 : index
    %303 = vector.load %arg3[%c2_207, %c0_208, %c0_209] : memref<9x8x512xf32, #tpu.memory_space<vmem>>, vector<1x8x512xf32>
    %304 = vector.shape_cast %303 : vector<1x8x512xf32> to vector<8x512xf32>
    %305 = arith.mulf %304, %302 : vector<8x512xf32>
    %306 = arith.addf %301, %305 : vector<8x512xf32>
    %c1_i32_210 = arith.constant 1 : i32
    %307 = tpu.dynamic_rotate %288 by %c1_i32_210 dim 1 : vector<8x512xf32>, i32 -> vector<8x512xf32>
    %c3_211 = arith.constant 3 : index
    %c0_212 = arith.constant 0 : index
    %c0_213 = arith.constant 0 : index
    %308 = vector.load %arg3[%c3_211, %c0_212, %c0_213] : memref<9x8x512xf32, #tpu.memory_space<vmem>>, vector<1x8x512xf32>
    %309 = vector.shape_cast %308 : vector<1x8x512xf32> to vector<8x512xf32>
    %310 = arith.mulf %309, %307 : vector<8x512xf32>
    %311 = arith.addf %306, %310 : vector<8x512xf32>
    %c511_i32_214 = arith.constant 511 : i32
    %312 = tpu.dynamic_rotate %288 by %c511_i32_214 dim 1 : vector<8x512xf32>, i32 -> vector<8x512xf32>
    %c5_215 = arith.constant 5 : index
    %c0_216 = arith.constant 0 : index
    %c0_217 = arith.constant 0 : index
    %313 = vector.load %arg3[%c5_215, %c0_216, %c0_217] : memref<9x8x512xf32, #tpu.memory_space<vmem>>, vector<1x8x512xf32>
    %314 = vector.shape_cast %313 : vector<1x8x512xf32> to vector<8x512xf32>
    %315 = arith.mulf %314, %312 : vector<8x512xf32>
    %316 = arith.addf %311, %315 : vector<8x512xf32>
    %c497_i32_218 = arith.constant 497 : i32
    %317 = tpu.dynamic_rotate %288 by %c497_i32_218 dim 1 : vector<8x512xf32>, i32 -> vector<8x512xf32>
    %c6_219 = arith.constant 6 : index
    %c0_220 = arith.constant 0 : index
    %c0_221 = arith.constant 0 : index
    %318 = vector.load %arg3[%c6_219, %c0_220, %c0_221] : memref<9x8x512xf32, #tpu.memory_space<vmem>>, vector<1x8x512xf32>
    %319 = vector.shape_cast %318 : vector<1x8x512xf32> to vector<8x512xf32>
    %320 = arith.mulf %319, %317 : vector<8x512xf32>
    %321 = arith.addf %316, %320 : vector<8x512xf32>
    %c496_i32_222 = arith.constant 496 : i32
    %322 = tpu.dynamic_rotate %288 by %c496_i32_222 dim 1 : vector<8x512xf32>, i32 -> vector<8x512xf32>
    %c7_223 = arith.constant 7 : index
    %c0_224 = arith.constant 0 : index
    %c0_225 = arith.constant 0 : index
    %323 = vector.load %arg3[%c7_223, %c0_224, %c0_225] : memref<9x8x512xf32, #tpu.memory_space<vmem>>, vector<1x8x512xf32>
    %324 = vector.shape_cast %323 : vector<1x8x512xf32> to vector<8x512xf32>
    %325 = arith.mulf %324, %322 : vector<8x512xf32>
    %326 = arith.addf %321, %325 : vector<8x512xf32>
    %c495_i32_226 = arith.constant 495 : i32
    %327 = tpu.dynamic_rotate %288 by %c495_i32_226 dim 1 : vector<8x512xf32>, i32 -> vector<8x512xf32>
    %c8_227 = arith.constant 8 : index
    %c0_228 = arith.constant 0 : index
    %c0_229 = arith.constant 0 : index
    %328 = vector.load %arg3[%c8_227, %c0_228, %c0_229] : memref<9x8x512xf32, #tpu.memory_space<vmem>>, vector<1x8x512xf32>
    %329 = vector.shape_cast %328 : vector<1x8x512xf32> to vector<8x512xf32>
    %330 = arith.mulf %329, %327 : vector<8x512xf32>
    %331 = arith.addf %326, %330 : vector<8x512xf32>
    %cst_230 = arith.constant dense<0.000000e+00> : vector<512xf32>
    %332 = vector.multi_reduction <add>, %331, %cst_230 [0] : vector<8x512xf32> to vector<512xf32>
    %333 = vector.shape_cast %332 : vector<512xf32> to vector<1x512xf32>
    %334 = vector.broadcast %0 : f32 to vector<1x512xf32>
    %335 = arith.addf %333, %334 : vector<1x512xf32>
    %c2_231 = arith.constant 2 : index
    %c0_232 = arith.constant 0 : index
    %c0_233 = arith.constant 0 : index
    %336 = vector.load %arg6[%c2_231, %c0_232, %c0_233] : memref<3x1x512xf32, #tpu.memory_space<vmem>>, vector<1x1x512xf32>
    %337 = vector.shape_cast %336 : vector<1x1x512xf32> to vector<1x512xf32>
    %338 = vector.shape_cast %335 : vector<1x512xf32> to vector<1x1x512xf32>
    tpu.vector_store %arg6[%c2_231, %c0_232, %c0_233], %338 {strides = array<i32>} : memref<3x1x512xf32, #tpu.memory_space<vmem>>, vector<1x1x512xf32>,
    return
  }
}

</mosaic_0001>

<llo_original>
// kernel: mul.58
$region0: #{mul.58}
  %s0 = inlined_call_operand.vmem [shape: f32[3,3,8], index: 0, kind: input, shape index: {}]
  %s1 = inlined_call_operand.vmem [shape: f32[9,8], index: 1, kind: output, shape index: {}]
  $region1: #{mul.58} parent=0
    #allocation0 [shape = 'u8[12288]{0}', space=vmem, size = 0x3000, scoped, tag = 'scoped mem for input reshape']
    %s3 = sshllo.u32 0, 4
    %s4 = smul.addr 4, 2
    %s5 = scalar_lea.vmem %s0, %s4
    %v6 = vld [vmem:[%s5] sm:%s3]
    %s7 = scalar_lea.vmem [#allocation0], 16
    %8 = vst [vmem:[%s7] sm:%s3] %v6
    %s9 = scalar_lea.vmem %s0, 4
    %v10 = vld [vmem:[%s9] sm:%s3]
    %s11 = scalar_lea.vmem [#allocation0], 8
    %12 = vst [vmem:[%s11] sm:%s3] %v10
    %v13 = vld [vmem:[%s0] sm:%s3]
    %14 = vst [vmem:[#allocation0] sm:%s3] %v13
    %v15 = vld [vmem:[#allocation0] sm:$0x7]
    %vm16 = vcmask 64512
    %17 = vst.msk [vmem:[%s1] sm:$0x7] %vm16, %v15
    %s18 = scalar_lea.vmem [#allocation0], 8
    %v19 = vld [vmem:[%s18] sm:$0x7]
    %vm20 = vcmask 64512
    %s21 = scalar_lea.vmem %s1, 3
    %22 = vst.msk [vmem:[%s21] sm:$0x7] %vm20, %v19
    %s23 = scalar_lea.vmem [#allocation0], 16
    %v24 = vld [vmem:[%s23] sm:$0x7]
    %vm25 = vcmask 64512
    %s26 = scalar_lea.vmem %s1, 6
    %27 = vst.msk [vmem:[%s26] sm:$0x7] %vm25, %v24

// kernel: nesterov_forward.1
$region0: #{nesterov_forward.1}
  #allocation0 [shape = 'u32[]', space=smem, size = 0x4, offset = 0x4, fixed_abs, tag = 'smem constant byte address 0x4 - core index']
  #allocation1 [shape = 'u32[144,128]{1,0:T(1,128)}', space=vmem, size = 0x12000, scoped, tag = 'internal scratch']
  #allocation2 [shape = 'f32[1]{0:T(128)S(6)}', space=smem, size = 0x200, scoped, tag = 'scoped memory for nesterov_forward.1']
  %s0 = inlined_call_operand.vmem [shape: f32[3,256,256], index: 0, kind: input, shape index: {}]
  %s1 = inlined_call_operand.vmem [shape: f32[3,2,256], index: 1, kind: input, shape index: {}]
  %s2 = inlined_call_operand.vmem [shape: f32[9,8,512], index: 2, kind: input, shape index: {}]
  %s3 = inlined_call_operand.vmem [shape: f32[9,8,512], index: 3, kind: input, shape index: {}]
  %s4 = inlined_call_operand.vmem [shape: f32[8,1], index: 4, kind: input, shape index: {}]
  %s5 = inlined_call_operand.<no memory space> [shape: f32[1], index: 5, kind: input, shape index: {}]
  %s6 = inlined_call_operand.vmem [shape: f32[3,1,512], index: 6, kind: output, shape index: {}]
  %s7 = sld [smem:[#allocation0]]
  $region34: #{nesterov_forward.1} parent=0
    _
  %s9 = ssub.s32 1, %s7
  %s10 = scalar_select 0, %s9, %s7
  %11 = sst [smem:[#allocation2]] %s5
  // Predicated region
  $region2: #{nesterov_forward.1} parent=0 // pred_check
    _
  $region3: #{nesterov_forward.1} parent=0 // pred_check_branch
    %13 = sbr.rel (0) target = $region5
  $region4: #{nesterov_forward.1} parent=0 // pred_region
    _
  $region5: #{nesterov_forward.1} parent=0 // pred_fallthru
    _
  // Predicated region
  $region6: #{nesterov_forward.1} parent=0 // pred_check
    _
  $region7: #{nesterov_forward.1} parent=0 // pred_check_branch
    %15 = sbr.rel (0) target = $region9
  $region8: #{nesterov_forward.1} parent=0 // pred_region
    _
  $region9: #{nesterov_forward.1} parent=0 // pred_fallthru
    _
  // Predicated region
  $region10: #{nesterov_forward.1} parent=0 // pred_check
    _
  $region11: #{nesterov_forward.1} parent=0 // pred_check_branch
    %17 = sbr.rel (0) target = $region13
  $region12: #{nesterov_forward.1} parent=0 // pred_region
    _
  $region13: #{nesterov_forward.1} parent=0 // pred_fallthru
    _
  // Predicated region
  $region14: #{nesterov_forward.1} parent=0 // pred_check
    _
  $region15: #{nesterov_forward.1} parent=0 // pred_check_branch
    %19 = sbr.rel (0) target = $region17
  $region16: #{nesterov_forward.1} parent=0 // pred_region
    _
  $region17: #{nesterov_forward.1} parent=0 // pred_fallthru
    _
  // Predicated region
  $region18: #{nesterov_forward.1} parent=0 // pred_check
    _
  $region19: #{nesterov_forward.1} parent=0 // pred_check_branch
    %21 = sbr.rel (0) target = $region21
  $region20: #{nesterov_forward.1} parent=0 // pred_region
    _
  $region21: #{nesterov_forward.1} parent=0 // pred_fallthru
    _
  // Predicated region
  $region22: #{nesterov_forward.1} parent=0 // pred_check
    _
  $region23: #{nesterov_forward.1} parent=0 // pred_check_branch
    %23 = sbr.rel (0) target = $region25
  $region24: #{nesterov_forward.1} parent=0 // pred_region
    _
  $region25: #{nesterov_forward.1} parent=0 // pred_fallthru
    _
  %s24 = sld [smem:[#allocation2]]
  %v25 = vld [vmem:[%s1] sm:$0xf]
  %v27 = vlaneseq
  %v28 = vshrl.u32 %v27, 7
  %v29 = vsub.s32 0, %v28
  %v30 = vrot.slane %v25, %v29
  %v31 = vlaneseq
  %v32 = vshrl.u32 %v31, 7
  %v33 = vsub.s32 2, %v32
  %v34 = vrot.slane %v25, %v33
  %v37 = vlaneseq
  %v38 = vshrl.u32 %v37, 7
  %v39 = vsub.s32 1, %v38
  %v40 = vrot.slane %v25, %v39
  %v41 = vlaneseq
  %v42 = vshrl.u32 %v41, 7
  %v43 = vsub.s32 3, %v42
  %v44 = vrot.slane %v25, %v43
  %v47 = vlaneseq
  %v48 = vshrl.u32 %v47, 7
  %v49 = vsub.s32 0, %v48
  %v50 = vrot.slane %v30, %v49
  %v51 = vlaneseq
  %v52 = vshrl.u32 %v51, 7
  %v53 = vsub.s32 0, %v52
  %v54 = vrot.slane %v34, %v53
  %v55 = vlaneseq
  %v56 = vshrl.u32 %v55, 7
  %v57 = vsub.s32 0, %v56
  %v58 = vrot.slane %v40, %v57
  %v59 = vlaneseq
  %v60 = vshrl.u32 %v59, 7
  %v61 = vsub.s32 0, %v60
  %v62 = vrot.slane %v44, %v61
  %s63 = scalar_lea.vmem %s2, 128
  %v64 = vld [vmem:[%s63] sm:$0xff]
  %v65 = vld [vmem:[%s63 + $0x8] sm:$0xff]
  %v66 = vld [vmem:[%s63 + $0x10] sm:$0xff]
  %v67 = vld [vmem:[%s63 + $0x18] sm:$0xff]
  %v68 = vmul.f32 %v64, %v50
  %v69 = vmul.f32 %v65, %v54
  %v70 = vmul.f32 %v66, %v58
  %v71 = vmul.f32 %v67, %v62
  %v72 = vld [vmem:[%s4] sm:$0xff]
  %74 = vset.pattern.permute.xlu0 0
  %75 = vperm.xlu0 %74, %v72
  %v76 = vpop.permute.xlu0 %75
  %v78 = vadd.f32 %v68, %v76
  %v79 = vadd.f32 %v69, %v76
  %v80 = vadd.f32 %v70, %v76
  %v81 = vadd.f32 %v71, %v76
  %82 = vrot.lane.b32.xlu0 %v50, 17
  %v83 = vpop.permute.xlu0 %82
  %84 = vrot.lane.b32.xlu0 %v54, 17
  %v85 = vpop.permute.xlu0 %84
  %86 = vrot.lane.b32.xlu0 %v58, 17
  %v87 = vpop.permute.xlu0 %86
  %88 = vrot.lane.b32.xlu0 %v62, 17
  %v89 = vpop.permute.xlu0 %88
  %v90 = vlaneseq
  %v91 = vand.u32 %v90, 127
  %vm92 = vcmp.lt.s32.totalorder %v91, 17
  %v93 = vsel %vm92, %v87, %v89
  %v94 = vsel %vm92, %v85, %v87
  %v95 = vsel %vm92, %v83, %v85
  %v96 = vsel %vm92, %v89, %v83
  %v97 = vld [vmem:[%s2] sm:$0xff]
  %v98 = vld [vmem:[%s2 + $0x8] sm:$0xff]
  %v99 = vld [vmem:[%s2 + $0x10] sm:$0xff]
  %v100 = vld [vmem:[%s2 + $0x18] sm:$0xff]
  %v101 = vmul.f32 %v97, %v96
  %v102 = vmul.f32 %v98, %v95
  %v103 = vmul.f32 %v99, %v94
  %v104 = vmul.f32 %v100, %v93
  %v105 = vadd.f32 %v78, %v101
  %v106 = vadd.f32 %v79, %v102
  %v107 = vadd.f32 %v80, %v103
  %v108 = vadd.f32 %v81, %v104
  %109 = vrot.lane.b32.xlu0 %v50, 16
  %v110 = vpop.permute.xlu0 %109
  %111 = vrot.lane.b32.xlu0 %v54, 16
  %v112 = vpop.permute.xlu0 %111
  %113 = vrot.lane.b32.xlu0 %v58, 16
  %v114 = vpop.permute.xlu0 %113
  %115 = vrot.lane.b32.xlu0 %v62, 16
  %v116 = vpop.permute.xlu0 %115
  %vm117 = vcmp.lt.s32.totalorder %v91, 16
  %v118 = vsel %vm117, %v114, %v116
  %v119 = vsel %vm117, %v112, %v114
  %v120 = vsel %vm117, %v110, %v112
  %v121 = vsel %vm117, %v116, %v110
  %s122 = scalar_lea.vmem %s2, 32
  %v123 = vld [vmem:[%s122] sm:$0xff]
  %v124 = vld [vmem:[%s122 + $0x8] sm:$0xff]
  %v125 = vld [vmem:[%s122 + $0x10] sm:$0xff]
  %v126 = vld [vmem:[%s122 + $0x18] sm:$0xff]
  %v127 = vmul.f32 %v123, %v121
  %v128 = vmul.f32 %v124, %v120
  %v129 = vmul.f32 %v125, %v119
  %v130 = vmul.f32 %v126, %v118
  %v131 = vadd.f32 %v105, %v127
  %v132 = vadd.f32 %v106, %v128
  %v133 = vadd.f32 %v107, %v129
  %v134 = vadd.f32 %v108, %v130
  %135 = vrot.lane.b32.xlu0 %v50, 15
  %v136 = vpop.permute.xlu0 %135
  %137 = vrot.lane.b32.xlu0 %v54, 15
  %v138 = vpop.permute.xlu0 %137
  %139 = vrot.lane.b32.xlu0 %v58, 15
  %v140 = vpop.permute.xlu0 %139
  %141 = vrot.lane.b32.xlu0 %v62, 15
  %v142 = vpop.permute.xlu0 %141
  %vm143 = vcmp.lt.s32.totalorder %v91, 15
  %v144 = vsel %vm143, %v140, %v142
  %v145 = vsel %vm143, %v138, %v140
  %v146 = vsel %vm143, %v136, %v138
  %v147 = vsel %vm143, %v142, %v136
  %s148 = scalar_lea.vmem %s2, 64
  %v149 = vld [vmem:[%s148] sm:$0xff]
  %v150 = vld [vmem:[%s148 + $0x8] sm:$0xff]
  %v151 = vld [vmem:[%s148 + $0x10] sm:$0xff]
  %v152 = vld [vmem:[%s148 + $0x18] sm:$0xff]
  %v153 = vmul.f32 %v149, %v147
  %v154 = vmul.f32 %v150, %v146
  %v155 = vmul.f32 %v151, %v145
  %v156 = vmul.f32 %v152, %v144
  %v157 = vadd.f32 %v131, %v153
  %v158 = vadd.f32 %v132, %v154
  %v159 = vadd.f32 %v133, %v155
  %v160 = vadd.f32 %v134, %v156
  %161 = vrot.lane.b32.xlu0 %v50, 1
  %v162 = vpop.permute.xlu0 %161
  %163 = vrot.lane.b32.xlu0 %v54, 1
  %v164 = vpop.permute.xlu0 %163
  %165 = vrot.lane.b32.xlu0 %v58, 1
  %v166 = vpop.permute.xlu0 %165
  %167 = vrot.lane.b32.xlu0 %v62, 1
  %v168 = vpop.permute.xlu0 %167
  %vm169 = vcmp.lt.s32.totalorder %v91, 1
  %v170 = vsel %vm169, %v166, %v168
  %v171 = vsel %vm169, %v164, %v166
  %v172 = vsel %vm169, %v162, %v164
  %v173 = vsel %vm169, %v168, %v162
  %s174 = scalar_lea.vmem %s2, 96
  %v175 = vld [vmem:[%s174] sm:$0xff]
  %v176 = vld [vmem:[%s174 + $0x8] sm:$0xff]
  %v177 = vld [vmem:[%s174 + $0x10] sm:$0xff]
  %v178 = vld [vmem:[%s174 + $0x18] sm:$0xff]
  %v179 = vmul.f32 %v175, %v173
  %v180 = vmul.f32 %v176, %v172
  %v181 = vmul.f32 %v177, %v171
  %v182 = vmul.f32 %v178, %v170
  %v183 = vadd.f32 %v157, %v179
  %v184 = vadd.f32 %v158, %v180
  %v185 = vadd.f32 %v159, %v181
  %v186 = vadd.f32 %v160, %v182
  %187 = vrot.lane.b32.xlu0 %v50, 127
  %v188 = vpop.permute.xlu0 %187
  %189 = vrot.lane.b32.xlu0 %v54, 127
  %v190 = vpop.permute.xlu0 %189
  %191 = vrot.lane.b32.xlu0 %v58, 127
  %v192 = vpop.permute.xlu0 %191
  %193 = vrot.lane.b32.xlu0 %v62, 127
  %v194 = vpop.permute.xlu0 %193
  %vm195 = vcmp.lt.s32.totalorder %v91, 127
  %v196 = vsel %vm195, %v192, %v194
  %v197 = vsel %vm195, %v190, %v192
  %v198 = vsel %vm195, %v188, %v190
  %v199 = vsel %vm195, %v194, %v188
  %s200 = scalar_lea.vmem %s2, 160
  %v201 = vld [vmem:[%s200] sm:$0xff]
  %v202 = vld [vmem:[%s200 + $0x8] sm:$0xff]
  %v203 = vld [vmem:[%s200 + $0x10] sm:$0xff]
  %v204 = vld [vmem:[%s200 + $0x18] sm:$0xff]
  %v205 = vmul.f32 %v201, %v198
  %v206 = vmul.f32 %v202, %v197
  %v207 = vmul.f32 %v203, %v196
  %v208 = vmul.f32 %v204, %v199
  %v209 = vadd.f32 %v183, %v205
  %v210 = vadd.f32 %v184, %v206
  %v211 = vadd.f32 %v185, %v207
  %v212 = vadd.f32 %v186, %v208
  %213 = vrot.lane.b32.xlu0 %v50, 113
  %v214 = vpop.permute.xlu0 %213
  %215 = vrot.lane.b32.xlu0 %v54, 113
  %v216 = vpop.permute.xlu0 %215
  %217 = vrot.lane.b32.xlu0 %v58, 113
  %v218 = vpop.permute.xlu0 %217
  %219 = vrot.lane.b32.xlu0 %v62, 113
  %v220 = vpop.permute.xlu0 %219
  %vm221 = vcmp.lt.s32.totalorder %v91, 113
  %v222 = vsel %vm221, %v218, %v220
  %v223 = vsel %vm221, %v216, %v218
  %v224 = vsel %vm221, %v214, %v216
  %v225 = vsel %vm221, %v220, %v214
  %s226 = scalar_lea.vmem %s2, 192
  %v227 = vld [vmem:[%s226] sm:$0xff]
  %v228 = vld [vmem:[%s226 + $0x8] sm:$0xff]
  %v229 = vld [vmem:[%s226 + $0x10] sm:$0xff]
  %v230 = vld [vmem:[%s226 + $0x18] sm:$0xff]
  %v231 = vmul.f32 %v227, %v224
  %v232 = vmul.f32 %v228, %v223
  %v233 = vmul.f32 %v229, %v222
  %v234 = vmul.f32 %v230, %v225
  %v235 = vadd.f32 %v209, %v231
  %v236 = vadd.f32 %v210, %v232
  %v237 = vadd.f32 %v211, %v233
  %v238 = vadd.f32 %v212, %v234
  %239 = vrot.lane.b32.xlu0 %v50, 112
  %v240 = vpop.permute.xlu0 %239
  %241 = vrot.lane.b32.xlu0 %v54, 112
  %v242 = vpop.permute.xlu0 %241
  %243 = vrot.lane.b32.xlu0 %v58, 112
  %v244 = vpop.permute.xlu0 %243
  %245 = vrot.lane.b32.xlu0 %v62, 112
  %v246 = vpop.permute.xlu0 %245
  %vm247 = vcmp.lt.s32.totalorder %v91, 112
  %v248 = vsel %vm247, %v244, %v246
  %v249 = vsel %vm247, %v242, %v244
  %v250 = vsel %vm247, %v240, %v242
  %v251 = vsel %vm247, %v246, %v240
  %s252 = scalar_lea.vmem %s2, 224
  %v253 = vld [vmem:[%s252] sm:$0xff]
  %v254 = vld [vmem:[%s252 + $0x8] sm:$0xff]
  %v255 = vld [vmem:[%s252 + $0x10] sm:$0xff]
  %v256 = vld [vmem:[%s252 + $0x18] sm:$0xff]
  %v257 = vmul.f32 %v253, %v250
  %v258 = vmul.f32 %v254, %v249
  %v259 = vmul.f32 %v255, %v248
  %v260 = vmul.f32 %v256, %v251
  %v261 = vadd.f32 %v235, %v257
  %v262 = vadd.f32 %v236, %v258
  %v263 = vadd.f32 %v237, %v259
  %v264 = vadd.f32 %v238, %v260
  %265 = vrot.lane.b32.xlu0 %v50, 111
  %v266 = vpop.permute.xlu0 %265
  %267 = vrot.lane.b32.xlu0 %v54, 111
  %v268 = vpop.permute.xlu0 %267
  %269 = vrot.lane.b32.xlu0 %v58, 111
  %v270 = vpop.permute.xlu0 %269
  %271 = vrot.lane.b32.xlu0 %v62, 111
  %v272 = vpop.permute.xlu0 %271
  %vm273 = vcmp.lt.s32.totalorder %v91, 111
  %v274 = vsel %vm273, %v270, %v272
  %v275 = vsel %vm273, %v268, %v270
  %v276 = vsel %vm273, %v266, %v268
  %v277 = vsel %vm273, %v272, %v266
  %s278 = scalar_lea.vmem %s2, 256
  %v279 = vld [vmem:[%s278] sm:$0xff]
  %v280 = vld [vmem:[%s278 + $0x8] sm:$0xff]
  %v281 = vld [vmem:[%s278 + $0x10] sm:$0xff]
  %v282 = vld [vmem:[%s278 + $0x18] sm:$0xff]
  %v283 = vmul.f32 %v279, %v276
  %v284 = vmul.f32 %v280, %v275
  %v285 = vmul.f32 %v281, %v274
  %v286 = vmul.f32 %v282, %v277
  %v287 = vadd.f32 %v261, %v283
  %v288 = vadd.f32 %v262, %v284
  %v289 = vadd.f32 %v263, %v285
  %v290 = vadd.f32 %v264, %v286
  %v291 = vmax.f32 %v287, 0.0
  %v292 = vmax.f32 %v288, 0.0
  %v293 = vmax.f32 %v289, 0.0
  %v294 = vmax.f32 %v290, 0.0
  %s295 = scalar_lea.vmem %s3, 128
  %v296 = vld [vmem:[%s295] sm:$0xff]
  %v297 = vld [vmem:[%s295 + $0x8] sm:$0xff]
  %v298 = vld [vmem:[%s295 + $0x10] sm:$0xff]
  %v299 = vld [vmem:[%s295 + $0x18] sm:$0xff]
  %v300 = vmul.f32 %v296, %v291
  %v301 = vmul.f32 %v297, %v292
  %v302 = vmul.f32 %v298, %v293
  %v303 = vmul.f32 %v299, %v294
  %304 = vrot.lane.b32.xlu0 %v291, 17
  %v305 = vpop.permute.xlu0 %304
  %306 = vrot.lane.b32.xlu0 %v292, 17
  %v307 = vpop.permute.xlu0 %306
  %308 = vrot.lane.b32.xlu0 %v293, 17
  %v309 = vpop.permute.xlu0 %308
  %310 = vrot.lane.b32.xlu0 %v294, 17
  %v311 = vpop.permute.xlu0 %310
  %v312 = vsel %vm92, %v309, %v311
  %v313 = vsel %vm92, %v307, %v309
  %v314 = vsel %vm92, %v305, %v307
  %v315 = vsel %vm92, %v311, %v305
  %v316 = vld [vmem:[%s3] sm:$0xff]
  %v317 = vld [vmem:[%s3 + $0x8] sm:$0xff]
  %v318 = vld [vmem:[%s3 + $0x10] sm:$0xff]
  %v319 = vld [vmem:[%s3 + $0x18] sm:$0xff]
  %v320 = vmul.f32 %v316, %v315
  %v321 = vmul.f32 %v317, %v314
  %v322 = vmul.f32 %v318, %v313
  %v323 = vmul.f32 %v319, %v312
  %v324 = vadd.f32 %v300, %v320
  %v325 = vadd.f32 %v301, %v321
  %v326 = vadd.f32 %v302, %v322
  %v327 = vadd.f32 %v303, %v323
  %328 = vrot.lane.b32.xlu0 %v291, 16
  %v329 = vpop.permute.xlu0 %328
  %330 = vrot.lane.b32.xlu0 %v292, 16
  %v331 = vpop.permute.xlu0 %330
  %332 = vrot.lane.b32.xlu0 %v293, 16
  %v333 = vpop.permute.xlu0 %332
  %334 = vrot.lane.b32.xlu0 %v294, 16
  %v335 = vpop.permute.xlu0 %334
  %v336 = vsel %vm117, %v333, %v335
  %v337 = vsel %vm117, %v331, %v333
  %v338 = vsel %vm117, %v329, %v331
  %v339 = vsel %vm117, %v335, %v329
  %s340 = scalar_lea.vmem %s3, 32
  %v341 = vld [vmem:[%s340] sm:$0xff]
  %v342 = vld [vmem:[%s340 + $0x8] sm:$0xff]
  %v343 = vld [vmem:[%s340 + $0x10] sm:$0xff]
  %v344 = vld [vmem:[%s340 + $0x18] sm:$0xff]
  %v345 = vmul.f32 %v341, %v339
  %v346 = vmul.f32 %v342, %v338
  %v347 = vmul.f32 %v343, %v337
  %v348 = vmul.f32 %v344, %v336
  %v349 = vadd.f32 %v324, %v345
  %v350 = vadd.f32 %v325, %v346
  %v351 = vadd.f32 %v326, %v347
  %v352 = vadd.f32 %v327, %v348
  %353 = vrot.lane.b32.xlu0 %v291, 15
  %v354 = vpop.permute.xlu0 %353
  %355 = vrot.lane.b32.xlu0 %v292, 15
  %v356 = vpop.permute.xlu0 %355
  %357 = vrot.lane.b32.xlu0 %v293, 15
  %v358 = vpop.permute.xlu0 %357
  %359 = vrot.lane.b32.xlu0 %v294, 15
  %v360 = vpop.permute.xlu0 %359
  %v361 = vsel %vm143, %v358, %v360
  %v362 = vsel %vm143, %v356, %v358
  %v363 = vsel %vm143, %v354, %v356
  %v364 = vsel %vm143, %v360, %v354
  %s365 = scalar_lea.vmem %s3, 64
  %v366 = vld [vmem:[%s365] sm:$0xff]
  %v367 = vld [vmem:[%s365 + $0x8] sm:$0xff]
  %v368 = vld [vmem:[%s365 + $0x10] sm:$0xff]
  %v369 = vld [vmem:[%s365 + $0x18] sm:$0xff]
  %v370 = vmul.f32 %v366, %v364
  %v371 = vmul.f32 %v367, %v363
  %v372 = vmul.f32 %v368, %v362
  %v373 = vmul.f32 %v369, %v361
  %v374 = vadd.f32 %v349, %v370
  %v375 = vadd.f32 %v350, %v371
  %v376 = vadd.f32 %v351, %v372
  %v377 = vadd.f32 %v352, %v373
  %378 = vrot.lane.b32.xlu0 %v291, 1
  %v379 = vpop.permute.xlu0 %378
  %380 = vrot.lane.b32.xlu0 %v292, 1
  %v381 = vpop.permute.xlu0 %380
  %382 = vrot.lane.b32.xlu0 %v293, 1
  %v383 = vpop.permute.xlu0 %382
  %384 = vrot.lane.b32.xlu0 %v294, 1
  %v385 = vpop.permute.xlu0 %384
  %v386 = vsel %vm169, %v383, %v385
  %v387 = vsel %vm169, %v381, %v383
  %v388 = vsel %vm169, %v379, %v381
  %v389 = vsel %vm169, %v385, %v379
  %s390 = scalar_lea.vmem %s3, 96
  %v391 = vld [vmem:[%s390] sm:$0xff]
  %v392 = vld [vmem:[%s390 + $0x8] sm:$0xff]
  %v393 = vld [vmem:[%s390 + $0x10] sm:$0xff]
  %v394 = vld [vmem:[%s390 + $0x18] sm:$0xff]
  %v395 = vmul.f32 %v391, %v389
  %v396 = vmul.f32 %v392, %v388
  %v397 = vmul.f32 %v393, %v387
  %v398 = vmul.f32 %v394, %v386
  %v399 = vadd.f32 %v374, %v395
  %v400 = vadd.f32 %v375, %v396
  %v401 = vadd.f32 %v376, %v397
  %v402 = vadd.f32 %v377, %v398
  %403 = vrot.lane.b32.xlu0 %v291, 127
  %v404 = vpop.permute.xlu0 %403
  %405 = vrot.lane.b32.xlu0 %v292, 127
  %v406 = vpop.permute.xlu0 %405
  %407 = vrot.lane.b32.xlu0 %v293, 127
  %v408 = vpop.permute.xlu0 %407
  %409 = vrot.lane.b32.xlu0 %v294, 127
  %v410 = vpop.permute.xlu0 %409
  %v411 = vsel %vm195, %v408, %v410
  %v412 = vsel %vm195, %v406, %v408
  %v413 = vsel %vm195, %v404, %v406
  %v414 = vsel %vm195, %v410, %v404
  %s415 = scalar_lea.vmem %s3, 160
  %v416 = vld [vmem:[%s415] sm:$0xff]
  %v417 = vld [vmem:[%s415 + $0x8] sm:$0xff]
  %v418 = vld [vmem:[%s415 + $0x10] sm:$0xff]
  %v419 = vld [vmem:[%s415 + $0x18] sm:$0xff]
  %v420 = vmul.f32 %v416, %v413
  %v421 = vmul.f32 %v417, %v412
  %v422 = vmul.f32 %v418, %v411
  %v423 = vmul.f32 %v419, %v414
  %v424 = vadd.f32 %v399, %v420
  %v425 = vadd.f32 %v400, %v421
  %v426 = vadd.f32 %v401, %v422
  %v427 = vadd.f32 %v402, %v423
  %428 = vrot.lane.b32.xlu0 %v291, 113
  %v429 = vpop.permute.xlu0 %428
  %430 = vrot.lane.b32.xlu0 %v292, 113
  %v431 = vpop.permute.xlu0 %430
  %432 = vrot.lane.b32.xlu0 %v293, 113
  %v433 = vpop.permute.xlu0 %432
  %434 = vrot.lane.b32.xlu0 %v294, 113
  %v435 = vpop.permute.xlu0 %434
  %v436 = vsel %vm221, %v433, %v435
  %v437 = vsel %vm221, %v431, %v433
  %v438 = vsel %vm221, %v429, %v431
  %v439 = vsel %vm221, %v435, %v429
  %s440 = scalar_lea.vmem %s3, 192
  %v441 = vld [vmem:[%s440] sm:$0xff]
  %v442 = vld [vmem:[%s440 + $0x8] sm:$0xff]
  %v443 = vld [vmem:[%s440 + $0x10] sm:$0xff]
  %v444 = vld [vmem:[%s440 + $0x18] sm:$0xff]
  %v445 = vmul.f32 %v441, %v438
  %v446 = vmul.f32 %v442, %v437
  %v447 = vmul.f32 %v443, %v436
  %v448 = vmul.f32 %v444, %v439
  %v449 = vadd.f32 %v424, %v445
  %v450 = vadd.f32 %v425, %v446
  %v451 = vadd.f32 %v426, %v447
  %v452 = vadd.f32 %v427, %v448
  %453 = vrot.lane.b32.xlu0 %v291, 112
  %v454 = vpop.permute.xlu0 %453
  %455 = vrot.lane.b32.xlu0 %v292, 112
  %v456 = vpop.permute.xlu0 %455
  %457 = vrot.lane.b32.xlu0 %v293, 112
  %v458 = vpop.permute.xlu0 %457
  %459 = vrot.lane.b32.xlu0 %v294, 112
  %v460 = vpop.permute.xlu0 %459
  %v461 = vsel %vm247, %v458, %v460
  %v462 = vsel %vm247, %v456, %v458
  %v463 = vsel %vm247, %v454, %v456
  %v464 = vsel %vm247, %v460, %v454
  %s465 = scalar_lea.vmem %s3, 224
  %v466 = vld [vmem:[%s465] sm:$0xff]
  %v467 = vld [vmem:[%s465 + $0x8] sm:$0xff]
  %v468 = vld [vmem:[%s465 + $0x10] sm:$0xff]
  %v469 = vld [vmem:[%s465 + $0x18] sm:$0xff]
  %v470 = vmul.f32 %v466, %v463
  %v471 = vmul.f32 %v467, %v462
  %v472 = vmul.f32 %v468, %v461
  %v473 = vmul.f32 %v469, %v464
  %v474 = vadd.f32 %v449, %v470
  %v475 = vadd.f32 %v450, %v471
  %v476 = vadd.f32 %v451, %v472
  %v477 = vadd.f32 %v452, %v473
  %478 = vrot.lane.b32.xlu0 %v291, 111
  %v479 = vpop.permute.xlu0 %478
  %480 = vrot.lane.b32.xlu0 %v292, 111
  %v481 = vpop.permute.xlu0 %480
  %482 = vrot.lane.b32.xlu0 %v293, 111
  %v483 = vpop.permute.xlu0 %482
  %484 = vrot.lane.b32.xlu0 %v294, 111
  %v485 = vpop.permute.xlu0 %484
  %v486 = vsel %vm273, %v483, %v485
  %v487 = vsel %vm273, %v481, %v483
  %v488 = vsel %vm273, %v479, %v481
  %v489 = vsel %vm273, %v485, %v479
  %s490 = scalar_lea.vmem %s3, 256
  %v491 = vld [vmem:[%s490] sm:$0xff]
  %v492 = vld [vmem:[%s490 + $0x8] sm:$0xff]
  %v493 = vld [vmem:[%s490 + $0x10] sm:$0xff]
  %v494 = vld [vmem:[%s490 + $0x18] sm:$0xff]
  %v495 = vmul.f32 %v491, %v488
  %v496 = vmul.f32 %v492, %v487
  %v497 = vmul.f32 %v493, %v486
  %v498 = vmul.f32 %v494, %v489
  %v499 = vadd.f32 %v474, %v495
  %v500 = vadd.f32 %v475, %v496
  %v501 = vadd.f32 %v476, %v497
  %v502 = vadd.f32 %v477, %v498
  %v503 = vrot.slane %v499, 4
  %v504 = vadd.f32 %v499, %v503
  %v505 = vrot.slane %v504, 2
  %v506 = vadd.f32 %v504, %v505
  %v507 = vrot.slane %v506, 1
  %v508 = vadd.f32 %v506, %v507
  %v509 = vrot.slane %v500, 4
  %v510 = vadd.f32 %v500, %v509
  %v511 = vrot.slane %v510, 2
  %v512 = vadd.f32 %v510, %v511
  %v513 = vrot.slane %v512, 1
  %v514 = vadd.f32 %v512, %v513
  %v515 = vrot.slane %v501, 4
  %v516 = vadd.f32 %v501, %v515
  %v517 = vrot.slane %v516, 2
  %v518 = vadd.f32 %v516, %v517
  %v519 = vrot.slane %v518, 1
  %v520 = vadd.f32 %v518, %v519
  %v521 = vrot.slane %v502, 4
  %v522 = vadd.f32 %v502, %v521
  %v523 = vrot.slane %v522, 2
  %v524 = vadd.f32 %v522, %v523
  %v525 = vrot.slane %v524, 1
  %v526 = vadd.f32 %v524, %v525
  %v527 = vstv %s24
  %v528 = vadd.f32 %v508, %v527
  %v529 = vadd.f32 %v514, %v527
  %v530 = vadd.f32 %v520, %v527
  %v531 = vadd.f32 %v526, %v527
  %v532 = vmul.f32 %v528, 0.0
  %v533 = vmul.f32 %v529, 0.0
  %v534 = vmul.f32 %v530, 0.0
  %v535 = vmul.f32 %v531, 0.0
  %v536 = vadd.f32 %v528, %v532
  %v537 = vadd.f32 %v529, %v533
  %v538 = vadd.f32 %v530, %v534
  %v539 = vadd.f32 %v531, %v535
  %v544 = vcombine.low %v528, %v529
  %v545 = vcombine.low %v530, %v531
  %v547 = vunpack.c.l.s4 1966171168
  %v548 = vunpack.c.0.s8 %v547
  %v549 = vlaneseq
  %v550 = vshrl.u32 %v549, 7
  %v551 = vsub.s32 %v548, %v550
  %v552 = vrot.slane %v544, %v551
  %v554 = vunpack.c.l.s4 1966171168
  %v555 = vunpack.c.0.s8 %v554
  %v556 = vlaneseq
  %v557 = vshrl.u32 %v556, 7
  %v558 = vsub.s32 %v555, %v557
  %v559 = vrot.slane %v545, %v558
  %v560 = vcombine.low %v552, %v559
  %v562 = vunpack.c.l.s4 1966171168
  %v563 = vunpack.c.0.s8 %v562
  %v564 = vlaneseq
  %v565 = vshrl.u32 %v564, 7
  %v566 = vsub.s32 %v563, %v565
  %v567 = vrot.slane %v560, %v566
  %v569 = vlaneseq
  %vm570 = vcmp.ge.s32.totalorder %v569, 0
  %vm571 = vcmp.lt.s32.totalorder %v569, 512
  %vm572 = vmand %vm570, %vm571
  %573 = vst.msk [vmem:[%s6] sm:$0xf] %vm572, %v567
  %vm574 = vcmask 1040384
  %v575 = vsel %vm574, %v536, %v538
  %v576 = vsel %vm574, %v537, %v539
  %s577 = scalar_lea.vmem %s0, 512
  %v578 = vld [vmem:[%s577] sm:$0xff]
  %v579 = vld [vmem:[%s577 + $0x8] sm:$0xff]
  %v580 = vld [vmem:[%s577 + $0x10] sm:$0xff]
  %v581 = vld [vmem:[%s577 + $0x18] sm:$0xff]
  %v582 = vld [vmem:[%s577 + $0x20] sm:$0xff]
  %v583 = vld [vmem:[%s577 + $0x28] sm:$0xff]
  %v584 = vld [vmem:[%s577 + $0x30] sm:$0xff]
  %v585 = vld [vmem:[%s577 + $0x38] sm:$0xff]
  %v586 = vld [vmem:[%s577 + $0x40] sm:$0xff]
  %v587 = vld [vmem:[%s577 + $0x48] sm:$0xff]
  %v588 = vld [vmem:[%s577 + $0x50] sm:$0xff]
  %v589 = vld [vmem:[%s577 + $0x58] sm:$0xff]
  %v590 = vld [vmem:[%s577 + $0x60] sm:$0xff]
  %v591 = vld [vmem:[%s577 + $0x68] sm:$0xff]
  %v592 = vld [vmem:[%s577 + $0x70] sm:$0xff]
  %v593 = vld [vmem:[%s577 + $0x78] sm:$0xff]
  %v594 = vld [vmem:[%s577 + $0x80] sm:$0xff]
  %v595 = vld [vmem:[%s577 + $0x88] sm:$0xff]
  %v596 = vld [vmem:[%s577 + $0x90] sm:$0xff]
  %v597 = vld [vmem:[%s577 + $0x98] sm:$0xff]
  %v598 = vld [vmem:[%s577 + $0xa0] sm:$0xff]
  %v599 = vld [vmem:[%s577 + $0xa8] sm:$0xff]
  %v600 = vld [vmem:[%s577 + $0xb0] sm:$0xff]
  %v601 = vld [vmem:[%s577 + $0xb8] sm:$0xff]
  %v602 = vld [vmem:[%s577 + $0xc0] sm:$0xff]
  %v603 = vld [vmem:[%s577 + $0xc8] sm:$0xff]
  %v604 = vld [vmem:[%s577 + $0xd0] sm:$0xff]
  %v605 = vld [vmem:[%s577 + $0xd8] sm:$0xff]
  %v606 = vld [vmem:[%s577 + $0xe0] sm:$0xff]
  %v607 = vld [vmem:[%s577 + $0xe8] sm:$0xff]
  %v608 = vld [vmem:[%s577 + $0xf0] sm:$0xff]
  %v609 = vld [vmem:[%s577 + $0xf8] sm:$0xff]
  %v610 = vld [vmem:[%s577 + $0x100] sm:$0xff]
  %v611 = vld [vmem:[%s577 + $0x108] sm:$0xff]
  %v612 = vld [vmem:[%s577 + $0x110] sm:$0xff]
  %v613 = vld [vmem:[%s577 + $0x118] sm:$0xff]
  %v614 = vld [vmem:[%s577 + $0x120] sm:$0xff]
  %v615 = vld [vmem:[%s577 + $0x128] sm:$0xff]
  %v616 = vld [vmem:[%s577 + $0x130] sm:$0xff]
  %v617 = vld [vmem:[%s577 + $0x138] sm:$0xff]
  %v618 = vld [vmem:[%s577 + $0x140] sm:$0xff]
  %v619 = vld [vmem:[%s577 + $0x148] sm:$0xff]
  %v620 = vld [vmem:[%s577 + $0x150] sm:$0xff]
  %v621 = vld [vmem:[%s577 + $0x158] sm:$0xff]
  %v622 = vld [vmem:[%s577 + $0x160] sm:$0xff]
  %v623 = vld [vmem:[%s577 + $0x168] sm:$0xff]
  %v624 = vld [vmem:[%s577 + $0x170] sm:$0xff]
  %v625 = vld [vmem:[%s577 + $0x178] sm:$0xff]
  %v626 = vld [vmem:[%s577 + $0x180] sm:$0xff]
  %v627 = vld [vmem:[%s577 + $0x188] sm:$0xff]
  %v628 = vld [vmem:[%s577 + $0x190] sm:$0xff]
  %v629 = vld [vmem:[%s577 + $0x198] sm:$0xff]
  %v630 = vld [vmem:[%s577 + $0x1a0] sm:$0xff]
  %v631 = vld [vmem:[%s577 + $0x1a8] sm:$0xff]
  %v632 = vld [vmem:[%s577 + $0x1b0] sm:$0xff]
  %v633 = vld [vmem:[%s577 + $0x1b8] sm:$0xff]
  %v634 = vld [vmem:[%s577 + $0x1c0] sm:$0xff]
  %v635 = vld [vmem:[%s577 + $0x1c8] sm:$0xff]
  %v636 = vld [vmem:[%s577 + $0x1d0] sm:$0xff]
  %v637 = vld [vmem:[%s577 + $0x1d8] sm:$0xff]
  %v638 = vld [vmem:[%s577 + $0x1e0] sm:$0xff]
  %v639 = vld [vmem:[%s577 + $0x1e8] sm:$0xff]
  %v640 = vld [vmem:[%s577 + $0x1f0] sm:$0xff]
  %v641 = vld [vmem:[%s577 + $0x1f8] sm:$0xff]
  %s642 = scalar_lea.vmem %s1, 4
  %v643 = vld [vmem:[%s642] sm:$0xf]
  %v646 = vunpack.c.l.s4 1983009808
  %v647 = vunpack.c.0.s8 %v646
  %v648 = vlaneseq
  %v649 = vshrl.u32 %v648, 7
  %v650 = vsub.s32 %v647, %v649
  %v651 = vrot.slane %v643, %v650
  %v652 = vcombine.high %v651, %v651
  %655 = vmatprep.subr.mxu0 %v579
  %656 = vmatpush1.msra.mxu0 %v578
  %657 = vmatprep.subr.mxu0 %v581
  %658 = vmatpush1.msra.mxu0 %v580
  %659 = vmatprep.subr.mxu0 %v583
  %660 = vmatpush1.msra.mxu0 %v582
  %661 = vmatprep.subr.mxu0 %v585
  %662 = vmatpush1.msra.mxu0 %v584
  %663 = vmatprep.subr.mxu0 %v587
  %664 = vmatpush1.msra.mxu0 %v586
  %665 = vmatprep.subr.mxu0 %v589
  %666 = vmatpush1.msra.mxu0 %v588
  %667 = vmatprep.subr.mxu0 %v591
  %668 = vmatpush1.msra.mxu0 %v590
  %669 = vmatprep.subr.mxu0 %v593
  %670 = vmatpush1.msra.mxu0 %v592
  %671 = vmatprep.subr.mxu0 %v595
  %672 = vmatpush1.msra.mxu0 %v594
  %673 = vmatprep.subr.mxu0 %v597
  %674 = vmatpush1.msra.mxu0 %v596
  %675 = vmatprep.subr.mxu0 %v599
  %676 = vmatpush1.msra.mxu0 %v598
  %677 = vmatprep.subr.mxu0 %v601
  %678 = vmatpush1.msra.mxu0 %v600
  %679 = vmatprep.subr.mxu0 %v603
  %680 = vmatpush1.msra.mxu0 %v602
  %681 = vmatprep.subr.mxu0 %v605
  %682 = vmatpush1.msra.mxu0 %v604
  %683 = vmatprep.subr.mxu0 %v607
  %684 = vmatpush1.msra.mxu0 %v606
  %685 = vmatprep.subr.mxu0 %v609
  %686 = vmatpush1.msra.mxu0 %v608
  %687 = vmatprep.subr.mxu0 %v611
  %688 = vmatpush1.msra.mxu0 %v610
  %689 = vmatprep.subr.mxu0 %v613
  %690 = vmatpush1.msra.mxu0 %v612
  %691 = vmatprep.subr.mxu0 %v615
  %692 = vmatpush1.msra.mxu0 %v614
  %693 = vmatprep.subr.mxu0 %v617
  %694 = vmatpush1.msra.mxu0 %v616
  %695 = vmatprep.subr.mxu0 %v619
  %696 = vmatpush1.msra.mxu0 %v618
  %697 = vmatprep.subr.mxu0 %v621
  %698 = vmatpush1.msra.mxu0 %v620
  %699 = vmatprep.subr.mxu0 %v623
  %700 = vmatpush1.msra.mxu0 %v622
  %701 = vmatprep.subr.mxu0 %v625
  %702 = vmatpush1.msra.mxu0 %v624
  %703 = vmatprep.subr.mxu0 %v627
  %704 = vmatpush1.msra.mxu0 %v626
  %705 = vmatprep.subr.mxu0 %v629
  %706 = vmatpush1.msra.mxu0 %v628
  %707 = vmatprep.subr.mxu0 %v631
  %708 = vmatpush1.msra.mxu0 %v630
  %709 = vmatprep.subr.mxu0 %v633
  %710 = vmatpush1.msra.mxu0 %v632
  %711 = vmatprep.subr.mxu0 %v635
  %712 = vmatpush1.msra.mxu0 %v634
  %713 = vmatprep.subr.mxu0 %v637
  %714 = vmatpush1.msra.mxu0 %v636
  %715 = vmatprep.subr.mxu0 %v639
  %716 = vmatpush1.msra.mxu0 %v638
  %717 = vmatprep.subr.mxu0 %v641
  %718 = vmatpush1.msra.mxu0 %v640
  %719 = vmatprep.mubr.f32.mxu0 %v576
  %720 = vmatmul.mubr.f32.gmra.mrb[0].mxu0 %v575
  %v721 = vpop.f32.mrb[0].mxu0
  %v722 = vadd.f32 %v651, %v721
  %v723 = vpop.f32.mrb[0].mxu0
  %v724 = vadd.f32 %v652, %v723
  %725 = vdwg.mxu0
  %v728 = vrot.slane %v722, 1
  %v729 = vrot.slane %v724, 1
  %v732 = vlaneseq
  %v733 = vshrl.u32 %v732, 7
  %v734 = vsub.s32 0, %v733
  %v735 = vrot.slane %v722, %v734
  %v736 = vlaneseq
  %v737 = vshrl.u32 %v736, 7
  %v738 = vsub.s32 0, %v737
  %v739 = vrot.slane %v724, %v738
  %v740 = vlaneseq
  %v741 = vshrl.u32 %v740, 7
  %v742 = vsub.s32 0, %v741
  %v743 = vrot.slane %v728, %v742
  %v744 = vlaneseq
  %v745 = vshrl.u32 %v744, 7
  %v746 = vsub.s32 0, %v745
  %v747 = vrot.slane %v729, %v746
  %v748 = vld [vmem:[%s63] sm:$0xff]
  %v749 = vld [vmem:[%s63 + $0x8] sm:$0xff]
  %v750 = vld [vmem:[%s63 + $0x10] sm:$0xff]
  %v751 = vld [vmem:[%s63 + $0x18] sm:$0xff]
  %v752 = vmul.f32 %v748, %v735
  %v753 = vmul.f32 %v749, %v739
  %v754 = vmul.f32 %v750, %v743
  %v755 = vmul.f32 %v751, %v747
  %v756 = vld [vmem:[%s4] sm:$0xff]
  %758 = vset.pattern.permute.xlu0 0
  %759 = vperm.xlu0 %758, %v756
  %v760 = vpop.permute.xlu0 %759
  %v762 = vadd.f32 %v752, %v760
  %v763 = vadd.f32 %v753, %v760
  %v764 = vadd.f32 %v754, %v760
  %v765 = vadd.f32 %v755, %v760
  %766 = vrot.lane.b32.xlu0 %v735, 17
  %v767 = vpop.permute.xlu0 %766
  %768 = vrot.lane.b32.xlu0 %v739, 17
  %v769 = vpop.permute.xlu0 %768
  %770 = vrot.lane.b32.xlu0 %v743, 17
  %v771 = vpop.permute.xlu0 %770
  %772 = vrot.lane.b32.xlu0 %v747, 17
  %v773 = vpop.permute.xlu0 %772
  %v774 = vsel %vm92, %v771, %v773
  %v775 = vsel %vm92, %v769, %v771
  %v776 = vsel %vm92, %v767, %v769
  %v777 = vsel %vm92, %v773, %v767
  %v778 = vld [vmem:[%s2] sm:$0xff]
  %v779 = vld [vmem:[%s2 + $0x8] sm:$0xff]
  %v780 = vld [vmem:[%s2 + $0x10] sm:$0xff]
  %v781 = vld [vmem:[%s2 + $0x18] sm:$0xff]
  %v782 = vmul.f32 %v778, %v777
  %v783 = vmul.f32 %v779, %v776
  %v784 = vmul.f32 %v780, %v775
  %v785 = vmul.f32 %v781, %v774
  %v786 = vadd.f32 %v762, %v782
  %v787 = vadd.f32 %v763, %v783
  %v788 = vadd.f32 %v764, %v784
  %v789 = vadd.f32 %v765, %v785
  %790 = vrot.lane.b32.xlu0 %v735, 16
  %v791 = vpop.permute.xlu0 %790
  %792 = vrot.lane.b32.xlu0 %v739, 16
  %v793 = vpop.permute.xlu0 %792
  %794 = vrot.lane.b32.xlu0 %v743, 16
  %v795 = vpop.permute.xlu0 %794
  %796 = vrot.lane.b32.xlu0 %v747, 16
  %v797 = vpop.permute.xlu0 %796
  %v798 = vsel %vm117, %v795, %v797
  %v799 = vsel %vm117, %v793, %v795
  %v800 = vsel %vm117, %v791, %v793
  %v801 = vsel %vm117, %v797, %v791
  %v802 = vld [vmem:[%s122] sm:$0xff]
  %v803 = vld [vmem:[%s122 + $0x8] sm:$0xff]
  %v804 = vld [vmem:[%s122 + $0x10] sm:$0xff]
  %v805 = vld [vmem:[%s122 + $0x18] sm:$0xff]
  %v806 = vmul.f32 %v802, %v801
  %v807 = vmul.f32 %v803, %v800
  %v808 = vmul.f32 %v804, %v799
  %v809 = vmul.f32 %v805, %v798
  %v810 = vadd.f32 %v786, %v806
  %v811 = vadd.f32 %v787, %v807
  %v812 = vadd.f32 %v788, %v808
  %v813 = vadd.f32 %v789, %v809
  %814 = vrot.lane.b32.xlu0 %v735, 15
  %v815 = vpop.permute.xlu0 %814
  %816 = vrot.lane.b32.xlu0 %v739, 15
  %v817 = vpop.permute.xlu0 %816
  %818 = vrot.lane.b32.xlu0 %v743, 15
  %v819 = vpop.permute.xlu0 %818
  %820 = vrot.lane.b32.xlu0 %v747, 15
  %v821 = vpop.permute.xlu0 %820
  %v822 = vsel %vm143, %v819, %v821
  %v823 = vsel %vm143, %v817, %v819
  %v824 = vsel %vm143, %v815, %v817
  %v825 = vsel %vm143, %v821, %v815
  %v826 = vld [vmem:[%s148] sm:$0xff]
  %v827 = vld [vmem:[%s148 + $0x8] sm:$0xff]
  %v828 = vld [vmem:[%s148 + $0x10] sm:$0xff]
  %v829 = vld [vmem:[%s148 + $0x18] sm:$0xff]
  %v830 = vmul.f32 %v826, %v825
  %v831 = vmul.f32 %v827, %v824
  %v832 = vmul.f32 %v828, %v823
  %v833 = vmul.f32 %v829, %v822
  %v834 = vadd.f32 %v810, %v830
  %v835 = vadd.f32 %v811, %v831
  %v836 = vadd.f32 %v812, %v832
  %v837 = vadd.f32 %v813, %v833
  %838 = vrot.lane.b32.xlu0 %v735, 1
  %v839 = vpop.permute.xlu0 %838
  %840 = vrot.lane.b32.xlu0 %v739, 1
  %v841 = vpop.permute.xlu0 %840
  %842 = vrot.lane.b32.xlu0 %v743, 1
  %v843 = vpop.permute.xlu0 %842
  %844 = vrot.lane.b32.xlu0 %v747, 1
  %v845 = vpop.permute.xlu0 %844
  %v846 = vsel %vm169, %v843, %v845
  %v847 = vsel %vm169, %v841, %v843
  %v848 = vsel %vm169, %v839, %v841
  %v849 = vsel %vm169, %v845, %v839
  %v850 = vld [vmem:[%s174] sm:$0xff]
  %v851 = vld [vmem:[%s174 + $0x8] sm:$0xff]
  %v852 = vld [vmem:[%s174 + $0x10] sm:$0xff]
  %v853 = vld [vmem:[%s174 + $0x18] sm:$0xff]
  %v854 = vmul.f32 %v850, %v849
  %v855 = vmul.f32 %v851, %v848
  %v856 = vmul.f32 %v852, %v847
  %v857 = vmul.f32 %v853, %v846
  %v858 = vadd.f32 %v834, %v854
  %v859 = vadd.f32 %v835, %v855
  %v860 = vadd.f32 %v836, %v856
  %v861 = vadd.f32 %v837, %v857
  %862 = vrot.lane.b32.xlu0 %v735, 127
  %v863 = vpop.permute.xlu0 %862
  %864 = vrot.lane.b32.xlu0 %v739, 127
  %v865 = vpop.permute.xlu0 %864
  %866 = vrot.lane.b32.xlu0 %v743, 127
  %v867 = vpop.permute.xlu0 %866
  %868 = vrot.lane.b32.xlu0 %v747, 127
  %v869 = vpop.permute.xlu0 %868
  %v870 = vsel %vm195, %v867, %v869
  %v871 = vsel %vm195, %v865, %v867
  %v872 = vsel %vm195, %v863, %v865
  %v873 = vsel %vm195, %v869, %v863
  %v874 = vld [vmem:[%s200] sm:$0xff]
  %v875 = vld [vmem:[%s200 + $0x8] sm:$0xff]
  %v876 = vld [vmem:[%s200 + $0x10] sm:$0xff]
  %v877 = vld [vmem:[%s200 + $0x18] sm:$0xff]
  %v878 = vmul.f32 %v874, %v872
  %v879 = vmul.f32 %v875, %v871
  %v880 = vmul.f32 %v876, %v870
  %v881 = vmul.f32 %v877, %v873
  %v882 = vadd.f32 %v858, %v878
  %v883 = vadd.f32 %v859, %v879
  %v884 = vadd.f32 %v860, %v880
  %v885 = vadd.f32 %v861, %v881
  %886 = vrot.lane.b32.xlu0 %v735, 113
  %v887 = vpop.permute.xlu0 %886
  %888 = vrot.lane.b32.xlu0 %v739, 113
  %v889 = vpop.permute.xlu0 %888
  %890 = vrot.lane.b32.xlu0 %v743, 113
  %v891 = vpop.permute.xlu0 %890
  %892 = vrot.lane.b32.xlu0 %v747, 113
  %v893 = vpop.permute.xlu0 %892
  %v894 = vsel %vm221, %v891, %v893
  %v895 = vsel %vm221, %v889, %v891
  %v896 = vsel %vm221, %v887, %v889
  %v897 = vsel %vm221, %v893, %v887
  %v898 = vld [vmem:[%s226] sm:$0xff]
  %v899 = vld [vmem:[%s226 + $0x8] sm:$0xff]
  %v900 = vld [vmem:[%s226 + $0x10] sm:$0xff]
  %v901 = vld [vmem:[%s226 + $0x18] sm:$0xff]
  %v902 = vmul.f32 %v898, %v896
  %v903 = vmul.f32 %v899, %v895
  %v904 = vmul.f32 %v900, %v894
  %v905 = vmul.f32 %v901, %v897
  %v906 = vadd.f32 %v882, %v902
  %v907 = vadd.f32 %v883, %v903
  %v908 = vadd.f32 %v884, %v904
  %v909 = vadd.f32 %v885, %v905
  %910 = vrot.lane.b32.xlu0 %v735, 112
  %v911 = vpop.permute.xlu0 %910
  %912 = vrot.lane.b32.xlu0 %v739, 112
  %v913 = vpop.permute.xlu0 %912
  %914 = vrot.lane.b32.xlu0 %v743, 112
  %v915 = vpop.permute.xlu0 %914
  %916 = vrot.lane.b32.xlu0 %v747, 112
  %v917 = vpop.permute.xlu0 %916
  %v918 = vsel %vm247, %v915, %v917
  %v919 = vsel %vm247, %v913, %v915
  %v920 = vsel %vm247, %v911, %v913
  %v921 = vsel %vm247, %v917, %v911
  %v922 = vld [vmem:[%s252] sm:$0xff]
  %v923 = vld [vmem:[%s252 + $0x8] sm:$0xff]
  %v924 = vld [vmem:[%s252 + $0x10] sm:$0xff]
  %v925 = vld [vmem:[%s252 + $0x18] sm:$0xff]
  %v926 = vmul.f32 %v922, %v920
  %v927 = vmul.f32 %v923, %v919
  %v928 = vmul.f32 %v924, %v918
  %v929 = vmul.f32 %v925, %v921
  %v930 = vadd.f32 %v906, %v926
  %v931 = vadd.f32 %v907, %v927
  %v932 = vadd.f32 %v908, %v928
  %v933 = vadd.f32 %v909, %v929
  %934 = vrot.lane.b32.xlu0 %v735, 111
  %v935 = vpop.permute.xlu0 %934
  %936 = vrot.lane.b32.xlu0 %v739, 111
  %v937 = vpop.permute.xlu0 %936
  %938 = vrot.lane.b32.xlu0 %v743, 111
  %v939 = vpop.permute.xlu0 %938
  %940 = vrot.lane.b32.xlu0 %v747, 111
  %v941 = vpop.permute.xlu0 %940
  %v942 = vsel %vm273, %v939, %v941
  %v943 = vsel %vm273, %v937, %v939
  %v944 = vsel %vm273, %v935, %v937
  %v945 = vsel %vm273, %v941, %v935
  %v946 = vld [vmem:[%s278] sm:$0xff]
  %v947 = vld [vmem:[%s278 + $0x8] sm:$0xff]
  %v948 = vld [vmem:[%s278 + $0x10] sm:$0xff]
  %v949 = vld [vmem:[%s278 + $0x18] sm:$0xff]
  %v950 = vmul.f32 %v946, %v944
  %v951 = vmul.f32 %v947, %v943
  %v952 = vmul.f32 %v948, %v942
  %v953 = vmul.f32 %v949, %v945
  %v954 = vadd.f32 %v930, %v950
  %v955 = vadd.f32 %v931, %v951
  %v956 = vadd.f32 %v932, %v952
  %v957 = vadd.f32 %v933, %v953
  %v958 = vmax.f32 %v954, 0.0
  %v959 = vmax.f32 %v955, 0.0
  %v960 = vmax.f32 %v956, 0.0
  %v961 = vmax.f32 %v957, 0.0
  %v962 = vld [vmem:[%s295] sm:$0xff]
  %v963 = vld [vmem:[%s295 + $0x8] sm:$0xff]
  %v964 = vld [vmem:[%s295 + $0x10] sm:$0xff]
  %v965 = vld [vmem:[%s295 + $0x18] sm:$0xff]
  %v966 = vmul.f32 %v962, %v958
  %v967 = vmul.f32 %v963, %v959
  %v968 = vmul.f32 %v964, %v960
  %v969 = vmul.f32 %v965, %v961
  %970 = vrot.lane.b32.xlu0 %v958, 17
  %v971 = vpop.permute.xlu0 %970
  %972 = vrot.lane.b32.xlu0 %v959, 17
  %v973 = vpop.permute.xlu0 %972
  %974 = vrot.lane.b32.xlu0 %v960, 17
  %v975 = vpop.permute.xlu0 %974
  %976 = vrot.lane.b32.xlu0 %v961, 17
  %v977 = vpop.permute.xlu0 %976
  %v978 = vsel %vm92, %v975, %v977
  %v979 = vsel %vm92, %v973, %v975
  %v980 = vsel %vm92, %v971, %v973
  %v981 = vsel %vm92, %v977, %v971
  %v982 = vld [vmem:[%s3] sm:$0xff]
  %v983 = vld [vmem:[%s3 + $0x8] sm:$0xff]
  %v984 = vld [vmem:[%s3 + $0x10] sm:$0xff]
  %v985 = vld [vmem:[%s3 + $0x18] sm:$0xff]
  %v986 = vmul.f32 %v982, %v981
  %v987 = vmul.f32 %v983, %v980
  %v988 = vmul.f32 %v984, %v979
  %v989 = vmul.f32 %v985, %v978
  %v990 = vadd.f32 %v966, %v986
  %v991 = vadd.f32 %v967, %v987
  %v992 = vadd.f32 %v968, %v988
  %v993 = vadd.f32 %v969, %v989
  %994 = vrot.lane.b32.xlu0 %v958, 16
  %v995 = vpop.permute.xlu0 %994
  %996 = vrot.lane.b32.xlu0 %v959, 16
  %v997 = vpop.permute.xlu0 %996
  %998 = vrot.lane.b32.xlu0 %v960, 16
  %v999 = vpop.permute.xlu0 %998
  %1000 = vrot.lane.b32.xlu0 %v961, 16
  %v1001 = vpop.permute.xlu0 %1000
  %v1002 = vsel %vm117, %v999, %v1001
  %v1003 = vsel %vm117, %v997, %v999
  %v1004 = vsel %vm117, %v995, %v997
  %v1005 = vsel %vm117, %v1001, %v995
  %v1006 = vld [vmem:[%s340] sm:$0xff]
  %v1007 = vld [vmem:[%s340 + $0x8] sm:$0xff]
  %v1008 = vld [vmem:[%s340 + $0x10] sm:$0xff]
  %v1009 = vld [vmem:[%s340 + $0x18] sm:$0xff]
  %v1010 = vmul.f32 %v1006, %v1005
  %v1011 = vmul.f32 %v1007, %v1004
  %v1012 = vmul.f32 %v1008, %v1003
  %v1013 = vmul.f32 %v1009, %v1002
  %v1014 = vadd.f32 %v990, %v1010
  %v1015 = vadd.f32 %v991, %v1011
  %v1016 = vadd.f32 %v992, %v1012
  %v1017 = vadd.f32 %v993, %v1013
  %1018 = vrot.lane.b32.xlu0 %v958, 15
  %v1019 = vpop.permute.xlu0 %1018
  %1020 = vrot.lane.b32.xlu0 %v959, 15
  %v1021 = vpop.permute.xlu0 %1020
  %1022 = vrot.lane.b32.xlu0 %v960, 15
  %v1023 = vpop.permute.xlu0 %1022
  %1024 = vrot.lane.b32.xlu0 %v961, 15
  %v1025 = vpop.permute.xlu0 %1024
  %v1026 = vsel %vm143, %v1023, %v1025
  %v1027 = vsel %vm143, %v1021, %v1023
  %v1028 = vsel %vm143, %v1019, %v1021
  %v1029 = vsel %vm143, %v1025, %v1019
  %v1030 = vld [vmem:[%s365] sm:$0xff]
  %v1031 = vld [vmem:[%s365 + $0x8] sm:$0xff]
  %v1032 = vld [vmem:[%s365 + $0x10] sm:$0xff]
  %v1033 = vld [vmem:[%s365 + $0x18] sm:$0xff]
  %v1034 = vmul.f32 %v1030, %v1029
  %v1035 = vmul.f32 %v1031, %v1028
  %v1036 = vmul.f32 %v1032, %v1027
  %v1037 = vmul.f32 %v1033, %v1026
  %v1038 = vadd.f32 %v1014, %v1034
  %v1039 = vadd.f32 %v1015, %v1035
  %v1040 = vadd.f32 %v1016, %v1036
  %v1041 = vadd.f32 %v1017, %v1037
  %1042 = vrot.lane.b32.xlu0 %v958, 1
  %v1043 = vpop.permute.xlu0 %1042
  %1044 = vrot.lane.b32.xlu0 %v959, 1
  %v1045 = vpop.permute.xlu0 %1044
  %1046 = vrot.lane.b32.xlu0 %v960, 1
  %v1047 = vpop.permute.xlu0 %1046
  %1048 = vrot.lane.b32.xlu0 %v961, 1
  %v1049 = vpop.permute.xlu0 %1048
  %v1050 = vsel %vm169, %v1047, %v1049
  %v1051 = vsel %vm169, %v1045, %v1047
  %v1052 = vsel %vm169, %v1043, %v1045
  %v1053 = vsel %vm169, %v1049, %v1043
  %v1054 = vld [vmem:[%s390] sm:$0xff]
  %v1055 = vld [vmem:[%s390 + $0x8] sm:$0xff]
  %v1056 = vld [vmem:[%s390 + $0x10] sm:$0xff]
  %v1057 = vld [vmem:[%s390 + $0x18] sm:$0xff]
  %v1058 = vmul.f32 %v1054, %v1053
  %v1059 = vmul.f32 %v1055, %v1052
  %v1060 = vmul.f32 %v1056, %v1051
  %v1061 = vmul.f32 %v1057, %v1050
  %v1062 = vadd.f32 %v1038, %v1058
  %v1063 = vadd.f32 %v1039, %v1059
  %v1064 = vadd.f32 %v1040, %v1060
  %v1065 = vadd.f32 %v1041, %v1061
  %1066 = vrot.lane.b32.xlu0 %v958, 127
  %v1067 = vpop.permute.xlu0 %1066
  %1068 = vrot.lane.b32.xlu0 %v959, 127
  %v1069 = vpop.permute.xlu0 %1068
  %1070 = vrot.lane.b32.xlu0 %v960, 127
  %v1071 = vpop.permute.xlu0 %1070
  %1072 = vrot.lane.b32.xlu0 %v961, 127
  %v1073 = vpop.permute.xlu0 %1072
  %v1074 = vsel %vm195, %v1071, %v1073
  %v1075 = vsel %vm195, %v1069, %v1071
  %v1076 = vsel %vm195, %v1067, %v1069
  %v1077 = vsel %vm195, %v1073, %v1067
  %v1078 = vld [vmem:[%s415] sm:$0xff]
  %v1079 = vld [vmem:[%s415 + $0x8] sm:$0xff]
  %v1080 = vld [vmem:[%s415 + $0x10] sm:$0xff]
  %v1081 = vld [vmem:[%s415 + $0x18] sm:$0xff]
  %v1082 = vmul.f32 %v1078, %v1076
  %v1083 = vmul.f32 %v1079, %v1075
  %v1084 = vmul.f32 %v1080, %v1074
  %v1085 = vmul.f32 %v1081, %v1077
  %v1086 = vadd.f32 %v1062, %v1082
  %v1087 = vadd.f32 %v1063, %v1083
  %v1088 = vadd.f32 %v1064, %v1084
  %v1089 = vadd.f32 %v1065, %v1085
  %1090 = vrot.lane.b32.xlu0 %v958, 113
  %v1091 = vpop.permute.xlu0 %1090
  %1092 = vrot.lane.b32.xlu0 %v959, 113
  %v1093 = vpop.permute.xlu0 %1092
  %1094 = vrot.lane.b32.xlu0 %v960, 113
  %v1095 = vpop.permute.xlu0 %1094
  %1096 = vrot.lane.b32.xlu0 %v961, 113
  %v1097 = vpop.permute.xlu0 %1096
  %v1098 = vsel %vm221, %v1095, %v1097
  %v1099 = vsel %vm221, %v1093, %v1095
  %v1100 = vsel %vm221, %v1091, %v1093
  %v1101 = vsel %vm221, %v1097, %v1091
  %v1102 = vld [vmem:[%s440] sm:$0xff]
  %v1103 = vld [vmem:[%s440 + $0x8] sm:$0xff]
  %v1104 = vld [vmem:[%s440 + $0x10] sm:$0xff]
  %v1105 = vld [vmem:[%s440 + $0x18] sm:$0xff]
  %v1106 = vmul.f32 %v1102, %v1100
  %v1107 = vmul.f32 %v1103, %v1099
  %v1108 = vmul.f32 %v1104, %v1098
  %v1109 = vmul.f32 %v1105, %v1101
  %v1110 = vadd.f32 %v1086, %v1106
  %v1111 = vadd.f32 %v1087, %v1107
  %v1112 = vadd.f32 %v1088, %v1108
  %v1113 = vadd.f32 %v1089, %v1109
  %1114 = vrot.lane.b32.xlu0 %v958, 112
  %v1115 = vpop.permute.xlu0 %1114
  %1116 = vrot.lane.b32.xlu0 %v959, 112
  %v1117 = vpop.permute.xlu0 %1116
  %1118 = vrot.lane.b32.xlu0 %v960, 112
  %v1119 = vpop.permute.xlu0 %1118
  %1120 = vrot.lane.b32.xlu0 %v961, 112
  %v1121 = vpop.permute.xlu0 %1120
  %v1122 = vsel %vm247, %v1119, %v1121
  %v1123 = vsel %vm247, %v1117, %v1119
  %v1124 = vsel %vm247, %v1115, %v1117
  %v1125 = vsel %vm247, %v1121, %v1115
  %v1126 = vld [vmem:[%s465] sm:$0xff]
  %v1127 = vld [vmem:[%s465 + $0x8] sm:$0xff]
  %v1128 = vld [vmem:[%s465 + $0x10] sm:$0xff]
  %v1129 = vld [vmem:[%s465 + $0x18] sm:$0xff]
  %v1130 = vmul.f32 %v1126, %v1124
  %v1131 = vmul.f32 %v1127, %v1123
  %v1132 = vmul.f32 %v1128, %v1122
  %v1133 = vmul.f32 %v1129, %v1125
  %v1134 = vadd.f32 %v1110, %v1130
  %v1135 = vadd.f32 %v1111, %v1131
  %v1136 = vadd.f32 %v1112, %v1132
  %v1137 = vadd.f32 %v1113, %v1133
  %1138 = vrot.lane.b32.xlu0 %v958, 111
  %v1139 = vpop.permute.xlu0 %1138
  %1140 = vrot.lane.b32.xlu0 %v959, 111
  %v1141 = vpop.permute.xlu0 %1140
  %1142 = vrot.lane.b32.xlu0 %v960, 111
  %v1143 = vpop.permute.xlu0 %1142
  %1144 = vrot.lane.b32.xlu0 %v961, 111
  %v1145 = vpop.permute.xlu0 %1144
  %v1146 = vsel %vm273, %v1143, %v1145
  %v1147 = vsel %vm273, %v1141, %v1143
  %v1148 = vsel %vm273, %v1139, %v1141
  %v1149 = vsel %vm273, %v1145, %v1139
  %v1150 = vld [vmem:[%s490] sm:$0xff]
  %v1151 = vld [vmem:[%s490 + $0x8] sm:$0xff]
  %v1152 = vld [vmem:[%s490 + $0x10] sm:$0xff]
  %v1153 = vld [vmem:[%s490 + $0x18] sm:$0xff]
  %v1154 = vmul.f32 %v1150, %v1148
  %v1155 = vmul.f32 %v1151, %v1147
  %v1156 = vmul.f32 %v1152, %v1146
  %v1157 = vmul.f32 %v1153, %v1149
  %v1158 = vadd.f32 %v1134, %v1154
  %v1159 = vadd.f32 %v1135, %v1155
  %v1160 = vadd.f32 %v1136, %v1156
  %v1161 = vadd.f32 %v1137, %v1157
  %v1162 = vrot.slane %v1158, 4
  %v1163 = vadd.f32 %v1158, %v1162
  %v1164 = vrot.slane %v1163, 2
  %v1165 = vadd.f32 %v1163, %v1164
  %v1166 = vrot.slane %v1165, 1
  %v1167 = vadd.f32 %v1165, %v1166
  %v1168 = vrot.slane %v1159, 4
  %v1169 = vadd.f32 %v1159, %v1168
  %v1170 = vrot.slane %v1169, 2
  %v1171 = vadd.f32 %v1169, %v1170
  %v1172 = vrot.slane %v1171, 1
  %v1173 = vadd.f32 %v1171, %v1172
  %v1174 = vrot.slane %v1160, 4
  %v1175 = vadd.f32 %v1160, %v1174
  %v1176 = vrot.slane %v1175, 2
  %v1177 = vadd.f32 %v1175, %v1176
  %v1178 = vrot.slane %v1177, 1
  %v1179 = vadd.f32 %v1177, %v1178
  %v1180 = vrot.slane %v1161, 4
  %v1181 = vadd.f32 %v1161, %v1180
  %v1182 = vrot.slane %v1181, 2
  %v1183 = vadd.f32 %v1181, %v1182
  %v1184 = vrot.slane %v1183, 1
  %v1185 = vadd.f32 %v1183, %v1184
  %v1186 = vadd.f32 %v1167, %v527
  %v1187 = vadd.f32 %v1173, %v527
  %v1188 = vadd.f32 %v1179, %v527
  %v1189 = vadd.f32 %v1185, %v527
  %v1190 = vsub.f32 %v1186, %v528
  %v1191 = vsub.f32 %v1187, %v529
  %v1192 = vsub.f32 %v1188, %v530
  %v1193 = vsub.f32 %v1189, %v531
  %v1194 = vmul.f32 %v1190, 0.2817535
  %v1195 = vmul.f32 %v1191, 0.2817535
  %v1196 = vmul.f32 %v1192, 0.2817535
  %v1197 = vmul.f32 %v1193, 0.2817535
  %v1198 = vadd.f32 %v1186, %v1194
  %v1199 = vadd.f32 %v1187, %v1195
  %v1200 = vadd.f32 %v1188, %v1196
  %v1201 = vadd.f32 %v1189, %v1197
  %v1206 = vcombine.low %v1186, %v1187
  %v1207 = vcombine.low %v1188, %v1189
  %v1209 = vunpack.c.l.s4 1966171168
  %v1210 = vunpack.c.0.s8 %v1209
  %v1211 = vlaneseq
  %v1212 = vshrl.u32 %v1211, 7
  %v1213 = vsub.s32 %v1210, %v1212
  %v1214 = vrot.slane %v1206, %v1213
  %v1216 = vunpack.c.l.s4 1966171168
  %v1217 = vunpack.c.0.s8 %v1216
  %v1218 = vlaneseq
  %v1219 = vshrl.u32 %v1218, 7
  %v1220 = vsub.s32 %v1217, %v1219
  %v1221 = vrot.slane %v1207, %v1220
  %v1222 = vcombine.low %v1214, %v1221
  %v1224 = vunpack.c.l.s4 1966171168
  %v1225 = vunpack.c.0.s8 %v1224
  %v1226 = vlaneseq
  %v1227 = vshrl.u32 %v1226, 7
  %v1228 = vsub.s32 %v1225, %v1227
  %v1229 = vrot.slane %v1222, %v1228
  %s1231 = scalar_lea.vmem %s6, 4
  %1232 = vst.msk [vmem:[%s1231] sm:$0xf] %vm572, %v1229
  %v1233 = vsel %vm574, %v1198, %v1200
  %v1234 = vsel %vm574, %v1199, %v1201
  %s1235 = scalar_lea.vmem %s0, 1024
  %v1236 = vld [vmem:[%s1235] sm:$0xff]
  %v1237 = vld [vmem:[%s1235 + $0x8] sm:$0xff]
  %v1238 = vld [vmem:[%s1235 + $0x10] sm:$0xff]
  %v1239 = vld [vmem:[%s1235 + $0x18] sm:$0xff]
  %v1240 = vld [vmem:[%s1235 + $0x20] sm:$0xff]
  %v1241 = vld [vmem:[%s1235 + $0x28] sm:$0xff]
  %v1242 = vld [vmem:[%s1235 + $0x30] sm:$0xff]
  %v1243 = vld [vmem:[%s1235 + $0x38] sm:$0xff]
  %v1244 = vld [vmem:[%s1235 + $0x40] sm:$0xff]
  %v1245 = vld [vmem:[%s1235 + $0x48] sm:$0xff]
  %v1246 = vld [vmem:[%s1235 + $0x50] sm:$0xff]
  %v1247 = vld [vmem:[%s1235 + $0x58] sm:$0xff]
  %v1248 = vld [vmem:[%s1235 + $0x60] sm:$0xff]
  %v1249 = vld [vmem:[%s1235 + $0x68] sm:$0xff]
  %v1250 = vld [vmem:[%s1235 + $0x70] sm:$0xff]
  %v1251 = vld [vmem:[%s1235 + $0x78] sm:$0xff]
  %v1252 = vld [vmem:[%s1235 + $0x80] sm:$0xff]
  %v1253 = vld [vmem:[%s1235 + $0x88] sm:$0xff]
  %v1254 = vld [vmem:[%s1235 + $0x90] sm:$0xff]
  %v1255 = vld [vmem:[%s1235 + $0x98] sm:$0xff]
  %v1256 = vld [vmem:[%s1235 + $0xa0] sm:$0xff]
  %v1257 = vld [vmem:[%s1235 + $0xa8] sm:$0xff]
  %v1258 = vld [vmem:[%s1235 + $0xb0] sm:$0xff]
  %v1259 = vld [vmem:[%s1235 + $0xb8] sm:$0xff]
  %v1260 = vld [vmem:[%s1235 + $0xc0] sm:$0xff]
  %v1261 = vld [vmem:[%s1235 + $0xc8] sm:$0xff]
  %v1262 = vld [vmem:[%s1235 + $0xd0] sm:$0xff]
  %v1263 = vld [vmem:[%s1235 + $0xd8] sm:$0xff]
  %v1264 = vld [vmem:[%s1235 + $0xe0] sm:$0xff]
  %v1265 = vld [vmem:[%s1235 + $0xe8] sm:$0xff]
  %v1266 = vld [vmem:[%s1235 + $0xf0] sm:$0xff]
  %v1267 = vld [vmem:[%s1235 + $0xf8] sm:$0xff]
  %v1268 = vld [vmem:[%s1235 + $0x100] sm:$0xff]
  %v1269 = vld [vmem:[%s1235 + $0x108] sm:$0xff]
  %v1270 = vld [vmem:[%s1235 + $0x110] sm:$0xff]
  %v1271 = vld [vmem:[%s1235 + $0x118] sm:$0xff]
  %v1272 = vld [vmem:[%s1235 + $0x120] sm:$0xff]
  %v1273 = vld [vmem:[%s1235 + $0x128] sm:$0xff]
  %v1274 = vld [vmem:[%s1235 + $0x130] sm:$0xff]
  %v1275 = vld [vmem:[%s1235 + $0x138] sm:$0xff]
  %v1276 = vld [vmem:[%s1235 + $0x140] sm:$0xff]
  %v1277 = vld [vmem:[%s1235 + $0x148] sm:$0xff]
  %v1278 = vld [vmem:[%s1235 + $0x150] sm:$0xff]
  %v1279 = vld [vmem:[%s1235 + $0x158] sm:$0xff]
  %v1280 = vld [vmem:[%s1235 + $0x160] sm:$0xff]
  %v1281 = vld [vmem:[%s1235 + $0x168] sm:$0xff]
  %v1282 = vld [vmem:[%s1235 + $0x170] sm:$0xff]
  %v1283 = vld [vmem:[%s1235 + $0x178] sm:$0xff]
  %v1284 = vld [vmem:[%s1235 + $0x180] sm:$0xff]
  %v1285 = vld [vmem:[%s1235 + $0x188] sm:$0xff]
  %v1286 = vld [vmem:[%s1235 + $0x190] sm:$0xff]
  %v1287 = vld [vmem:[%s1235 + $0x198] sm:$0xff]
  %v1288 = vld [vmem:[%s1235 + $0x1a0] sm:$0xff]
  %v1289 = vld [vmem:[%s1235 + $0x1a8] sm:$0xff]
  %v1290 = vld [vmem:[%s1235 + $0x1b0] sm:$0xff]
  %v1291 = vld [vmem:[%s1235 + $0x1b8] sm:$0xff]
  %v1292 = vld [vmem:[%s1235 + $0x1c0] sm:$0xff]
  %v1293 = vld [vmem:[%s1235 + $0x1c8] sm:$0xff]
  %v1294 = vld [vmem:[%s1235 + $0x1d0] sm:$0xff]
  %v1295 = vld [vmem:[%s1235 + $0x1d8] sm:$0xff]
  %v1296 = vld [vmem:[%s1235 + $0x1e0] sm:$0xff]
  %v1297 = vld [vmem:[%s1235 + $0x1e8] sm:$0xff]
  %v1298 = vld [vmem:[%s1235 + $0x1f0] sm:$0xff]
  %v1299 = vld [vmem:[%s1235 + $0x1f8] sm:$0xff]
  %s1300 = scalar_lea.vmem %s1, 8
  %v1301 = vld [vmem:[%s1300] sm:$0xf]
  %v1304 = vunpack.c.l.s4 1983009808
  %v1305 = vunpack.c.0.s8 %v1304
  %v1306 = vlaneseq
  %v1307 = vshrl.u32 %v1306, 7
  %v1308 = vsub.s32 %v1305, %v1307
  %v1309 = vrot.slane %v1301, %v1308
  %v1310 = vcombine.high %v1309, %v1309
  %1313 = vmatprep.subr.mxu0 %v1237
  %1314 = vmatpush1.msra.mxu0 %v1236
  %1315 = vmatprep.subr.mxu0 %v1239
  %1316 = vmatpush1.msra.mxu0 %v1238
  %1317 = vmatprep.subr.mxu0 %v1241
  %1318 = vmatpush1.msra.mxu0 %v1240
  %1319 = vmatprep.subr.mxu0 %v1243
  %1320 = vmatpush1.msra.mxu0 %v1242
  %1321 = vmatprep.subr.mxu0 %v1245
  %1322 = vmatpush1.msra.mxu0 %v1244
  %1323 = vmatprep.subr.mxu0 %v1247
  %1324 = vmatpush1.msra.mxu0 %v1246
  %1325 = vmatprep.subr.mxu0 %v1249
  %1326 = vmatpush1.msra.mxu0 %v1248
  %1327 = vmatprep.subr.mxu0 %v1251
  %1328 = vmatpush1.msra.mxu0 %v1250
  %1329 = vmatprep.subr.mxu0 %v1253
  %1330 = vmatpush1.msra.mxu0 %v1252
  %1331 = vmatprep.subr.mxu0 %v1255
  %1332 = vmatpush1.msra.mxu0 %v1254
  %1333 = vmatprep.subr.mxu0 %v1257
  %1334 = vmatpush1.msra.mxu0 %v1256
  %1335 = vmatprep.subr.mxu0 %v1259
  %1336 = vmatpush1.msra.mxu0 %v1258
  %1337 = vmatprep.subr.mxu0 %v1261
  %1338 = vmatpush1.msra.mxu0 %v1260
  %1339 = vmatprep.subr.mxu0 %v1263
  %1340 = vmatpush1.msra.mxu0 %v1262
  %1341 = vmatprep.subr.mxu0 %v1265
  %1342 = vmatpush1.msra.mxu0 %v1264
  %1343 = vmatprep.subr.mxu0 %v1267
  %1344 = vmatpush1.msra.mxu0 %v1266
  %1345 = vmatprep.subr.mxu0 %v1269
  %1346 = vmatpush1.msra.mxu0 %v1268
  %1347 = vmatprep.subr.mxu0 %v1271
  %1348 = vmatpush1.msra.mxu0 %v1270
  %1349 = vmatprep.subr.mxu0 %v1273
  %1350 = vmatpush1.msra.mxu0 %v1272
  %1351 = vmatprep.subr.mxu0 %v1275
  %1352 = vmatpush1.msra.mxu0 %v1274
  %1353 = vmatprep.subr.mxu0 %v1277
  %1354 = vmatpush1.msra.mxu0 %v1276
  %1355 = vmatprep.subr.mxu0 %v1279
  %1356 = vmatpush1.msra.mxu0 %v1278
  %1357 = vmatprep.subr.mxu0 %v1281
  %1358 = vmatpush1.msra.mxu0 %v1280
  %1359 = vmatprep.subr.mxu0 %v1283
  %1360 = vmatpush1.msra.mxu0 %v1282
  %1361 = vmatprep.subr.mxu0 %v1285
  %1362 = vmatpush1.msra.mxu0 %v1284
  %1363 = vmatprep.subr.mxu0 %v1287
  %1364 = vmatpush1.msra.mxu0 %v1286
  %1365 = vmatprep.subr.mxu0 %v1289
  %1366 = vmatpush1.msra.mxu0 %v1288
  %1367 = vmatprep.subr.mxu0 %v1291
  %1368 = vmatpush1.msra.mxu0 %v1290
  %1369 = vmatprep.subr.mxu0 %v1293
  %1370 = vmatpush1.msra.mxu0 %v1292
  %1371 = vmatprep.subr.mxu0 %v1295
  %1372 = vmatpush1.msra.mxu0 %v1294
  %1373 = vmatprep.subr.mxu0 %v1297
  %1374 = vmatpush1.msra.mxu0 %v1296
  %1375 = vmatprep.subr.mxu0 %v1299
  %1376 = vmatpush1.msra.mxu0 %v1298
  %1377 = vmatprep.mubr.f32.mxu0 %v1234
  %1378 = vmatmul.mubr.f32.gmra.mrb[0].mxu0 %v1233
  %v1379 = vpop.f32.mrb[0].mxu0
  %v1380 = vadd.f32 %v1309, %v1379
  %v1381 = vpop.f32.mrb[0].mxu0
  %v1382 = vadd.f32 %v1310, %v1381
  %1383 = vdwg.mxu0
  %v1386 = vrot.slane %v1380, 1
  %v1387 = vrot.slane %v1382, 1
  %v1390 = vlaneseq
  %v1391 = vshrl.u32 %v1390, 7
  %v1392 = vsub.s32 0, %v1391
  %v1393 = vrot.slane %v1380, %v1392
  %v1394 = vlaneseq
  %v1395 = vshrl.u32 %v1394, 7
  %v1396 = vsub.s32 0, %v1395
  %v1397 = vrot.slane %v1382, %v1396
  %v1398 = vlaneseq
  %v1399 = vshrl.u32 %v1398, 7
  %v1400 = vsub.s32 0, %v1399
  %v1401 = vrot.slane %v1386, %v1400
  %v1402 = vlaneseq
  %v1403 = vshrl.u32 %v1402, 7
  %v1404 = vsub.s32 0, %v1403
  %v1405 = vrot.slane %v1387, %v1404
  %v1406 = vld [vmem:[%s63] sm:$0xff]
  %v1407 = vld [vmem:[%s63 + $0x8] sm:$0xff]
  %v1408 = vld [vmem:[%s63 + $0x10] sm:$0xff]
  %v1409 = vld [vmem:[%s63 + $0x18] sm:$0xff]
  %v1410 = vmul.f32 %v1406, %v1393
  %v1411 = vmul.f32 %v1407, %v1397
  %v1412 = vmul.f32 %v1408, %v1401
  %v1413 = vmul.f32 %v1409, %v1405
  %v1414 = vld [vmem:[%s4] sm:$0xff]
  %1416 = vset.pattern.permute.xlu0 0
  %1417 = vperm.xlu0 %1416, %v1414
  %v1418 = vpop.permute.xlu0 %1417
  %v1420 = vadd.f32 %v1410, %v1418
  %v1421 = vadd.f32 %v1411, %v1418
  %v1422 = vadd.f32 %v1412, %v1418
  %v1423 = vadd.f32 %v1413, %v1418
  %1424 = vrot.lane.b32.xlu0 %v1393, 17
  %v1425 = vpop.permute.xlu0 %1424
  %1426 = vrot.lane.b32.xlu0 %v1397, 17
  %v1427 = vpop.permute.xlu0 %1426
  %1428 = vrot.lane.b32.xlu0 %v1401, 17
  %v1429 = vpop.permute.xlu0 %1428
  %1430 = vrot.lane.b32.xlu0 %v1405, 17
  %v1431 = vpop.permute.xlu0 %1430
  %v1432 = vsel %vm92, %v1429, %v1431
  %v1433 = vsel %vm92, %v1427, %v1429
  %v1434 = vsel %vm92, %v1425, %v1427
  %v1435 = vsel %vm92, %v1431, %v1425
  %v1436 = vld [vmem:[%s2] sm:$0xff]
  %v1437 = vld [vmem:[%s2 + $0x8] sm:$0xff]
  %v1438 = vld [vmem:[%s2 + $0x10] sm:$0xff]
  %v1439 = vld [vmem:[%s2 + $0x18] sm:$0xff]
  %v1440 = vmul.f32 %v1436, %v1435
  %v1441 = vmul.f32 %v1437, %v1434
  %v1442 = vmul.f32 %v1438, %v1433
  %v1443 = vmul.f32 %v1439, %v1432
  %v1444 = vadd.f32 %v1420, %v1440
  %v1445 = vadd.f32 %v1421, %v1441
  %v1446 = vadd.f32 %v1422, %v1442
  %v1447 = vadd.f32 %v1423, %v1443
  %1448 = vrot.lane.b32.xlu0 %v1393, 16
  %v1449 = vpop.permute.xlu0 %1448
  %1450 = vrot.lane.b32.xlu0 %v1397, 16
  %v1451 = vpop.permute.xlu0 %1450
  %1452 = vrot.lane.b32.xlu0 %v1401, 16
  %v1453 = vpop.permute.xlu0 %1452
  %1454 = vrot.lane.b32.xlu0 %v1405, 16
  %v1455 = vpop.permute.xlu0 %1454
  %v1456 = vsel %vm117, %v1453, %v1455
  %v1457 = vsel %vm117, %v1451, %v1453
  %v1458 = vsel %vm117, %v1449, %v1451
  %v1459 = vsel %vm117, %v1455, %v1449
  %v1460 = vld [vmem:[%s122] sm:$0xff]
  %v1461 = vld [vmem:[%s122 + $0x8] sm:$0xff]
  %v1462 = vld [vmem:[%s122 + $0x10] sm:$0xff]
  %v1463 = vld [vmem:[%s122 + $0x18] sm:$0xff]
  %v1464 = vmul.f32 %v1460, %v1459
  %v1465 = vmul.f32 %v1461, %v1458
  %v1466 = vmul.f32 %v1462, %v1457
  %v1467 = vmul.f32 %v1463, %v1456
  %v1468 = vadd.f32 %v1444, %v1464
  %v1469 = vadd.f32 %v1445, %v1465
  %v1470 = vadd.f32 %v1446, %v1466
  %v1471 = vadd.f32 %v1447, %v1467
  %1472 = vrot.lane.b32.xlu0 %v1393, 15
  %v1473 = vpop.permute.xlu0 %1472
  %1474 = vrot.lane.b32.xlu0 %v1397, 15
  %v1475 = vpop.permute.xlu0 %1474
  %1476 = vrot.lane.b32.xlu0 %v1401, 15
  %v1477 = vpop.permute.xlu0 %1476
  %1478 = vrot.lane.b32.xlu0 %v1405, 15
  %v1479 = vpop.permute.xlu0 %1478
  %v1480 = vsel %vm143, %v1477, %v1479
  %v1481 = vsel %vm143, %v1475, %v1477
  %v1482 = vsel %vm143, %v1473, %v1475
  %v1483 = vsel %vm143, %v1479, %v1473
  %v1484 = vld [vmem:[%s148] sm:$0xff]
  %v1485 = vld [vmem:[%s148 + $0x8] sm:$0xff]
  %v1486 = vld [vmem:[%s148 + $0x10] sm:$0xff]
  %v1487 = vld [vmem:[%s148 + $0x18] sm:$0xff]
  %v1488 = vmul.f32 %v1484, %v1483
  %v1489 = vmul.f32 %v1485, %v1482
  %v1490 = vmul.f32 %v1486, %v1481
  %v1491 = vmul.f32 %v1487, %v1480
  %v1492 = vadd.f32 %v1468, %v1488
  %v1493 = vadd.f32 %v1469, %v1489
  %v1494 = vadd.f32 %v1470, %v1490
  %v1495 = vadd.f32 %v1471, %v1491
  %1496 = vrot.lane.b32.xlu0 %v1393, 1
  %v1497 = vpop.permute.xlu0 %1496
  %1498 = vrot.lane.b32.xlu0 %v1397, 1
  %v1499 = vpop.permute.xlu0 %1498
  %1500 = vrot.lane.b32.xlu0 %v1401, 1
  %v1501 = vpop.permute.xlu0 %1500
  %1502 = vrot.lane.b32.xlu0 %v1405, 1
  %v1503 = vpop.permute.xlu0 %1502
  %v1504 = vsel %vm169, %v1501, %v1503
  %v1505 = vsel %vm169, %v1499, %v1501
  %v1506 = vsel %vm169, %v1497, %v1499
  %v1507 = vsel %vm169, %v1503, %v1497
  %v1508 = vld [vmem:[%s174] sm:$0xff]
  %v1509 = vld [vmem:[%s174 + $0x8] sm:$0xff]
  %v1510 = vld [vmem:[%s174 + $0x10] sm:$0xff]
  %v1511 = vld [vmem:[%s174 + $0x18] sm:$0xff]
  %v1512 = vmul.f32 %v1508, %v1507
  %v1513 = vmul.f32 %v1509, %v1506
  %v1514 = vmul.f32 %v1510, %v1505
  %v1515 = vmul.f32 %v1511, %v1504
  %v1516 = vadd.f32 %v1492, %v1512
  %v1517 = vadd.f32 %v1493, %v1513
  %v1518 = vadd.f32 %v1494, %v1514
  %v1519 = vadd.f32 %v1495, %v1515
  %1520 = vrot.lane.b32.xlu0 %v1393, 127
  %v1521 = vpop.permute.xlu0 %1520
  %1522 = vrot.lane.b32.xlu0 %v1397, 127
  %v1523 = vpop.permute.xlu0 %1522
  %1524 = vrot.lane.b32.xlu0 %v1401, 127
  %v1525 = vpop.permute.xlu0 %1524
  %1526 = vrot.lane.b32.xlu0 %v1405, 127
  %v1527 = vpop.permute.xlu0 %1526
  %v1528 = vsel %vm195, %v1525, %v1527
  %v1529 = vsel %vm195, %v1523, %v1525
  %v1530 = vsel %vm195, %v1521, %v1523
  %v1531 = vsel %vm195, %v1527, %v1521
  %v1532 = vld [vmem:[%s200] sm:$0xff]
  %v1533 = vld [vmem:[%s200 + $0x8] sm:$0xff]
  %v1534 = vld [vmem:[%s200 + $0x10] sm:$0xff]
  %v1535 = vld [vmem:[%s200 + $0x18] sm:$0xff]
  %v1536 = vmul.f32 %v1532, %v1530
  %v1537 = vmul.f32 %v1533, %v1529
  %v1538 = vmul.f32 %v1534, %v1528
  %v1539 = vmul.f32 %v1535, %v1531
  %v1540 = vadd.f32 %v1516, %v1536
  %v1541 = vadd.f32 %v1517, %v1537
  %v1542 = vadd.f32 %v1518, %v1538
  %v1543 = vadd.f32 %v1519, %v1539
  %1544 = vrot.lane.b32.xlu0 %v1393, 113
  %v1545 = vpop.permute.xlu0 %1544
  %1546 = vrot.lane.b32.xlu0 %v1397, 113
  %v1547 = vpop.permute.xlu0 %1546
  %1548 = vrot.lane.b32.xlu0 %v1401, 113
  %v1549 = vpop.permute.xlu0 %1548
  %1550 = vrot.lane.b32.xlu0 %v1405, 113
  %v1551 = vpop.permute.xlu0 %1550
  %v1552 = vsel %vm221, %v1549, %v1551
  %v1553 = vsel %vm221, %v1547, %v1549
  %v1554 = vsel %vm221, %v1545, %v1547
  %v1555 = vsel %vm221, %v1551, %v1545
  %v1556 = vld [vmem:[%s226] sm:$0xff]
  %v1557 = vld [vmem:[%s226 + $0x8] sm:$0xff]
  %v1558 = vld [vmem:[%s226 + $0x10] sm:$0xff]
  %v1559 = vld [vmem:[%s226 + $0x18] sm:$0xff]
  %v1560 = vmul.f32 %v1556, %v1554
  %v1561 = vmul.f32 %v1557, %v1553
  %v1562 = vmul.f32 %v1558, %v1552
  %v1563 = vmul.f32 %v1559, %v1555
  %v1564 = vadd.f32 %v1540, %v1560
  %v1565 = vadd.f32 %v1541, %v1561
  %v1566 = vadd.f32 %v1542, %v1562
  %v1567 = vadd.f32 %v1543, %v1563
  %1568 = vrot.lane.b32.xlu0 %v1393, 112
  %v1569 = vpop.permute.xlu0 %1568
  %1570 = vrot.lane.b32.xlu0 %v1397, 112
  %v1571 = vpop.permute.xlu0 %1570
  %1572 = vrot.lane.b32.xlu0 %v1401, 112
  %v1573 = vpop.permute.xlu0 %1572
  %1574 = vrot.lane.b32.xlu0 %v1405, 112
  %v1575 = vpop.permute.xlu0 %1574
  %v1576 = vsel %vm247, %v1573, %v1575
  %v1577 = vsel %vm247, %v1571, %v1573
  %v1578 = vsel %vm247, %v1569, %v1571
  %v1579 = vsel %vm247, %v1575, %v1569
  %v1580 = vld [vmem:[%s252] sm:$0xff]
  %v1581 = vld [vmem:[%s252 + $0x8] sm:$0xff]
  %v1582 = vld [vmem:[%s252 + $0x10] sm:$0xff]
  %v1583 = vld [vmem:[%s252 + $0x18] sm:$0xff]
  %v1584 = vmul.f32 %v1580, %v1578
  %v1585 = vmul.f32 %v1581, %v1577
  %v1586 = vmul.f32 %v1582, %v1576
  %v1587 = vmul.f32 %v1583, %v1579
  %v1588 = vadd.f32 %v1564, %v1584
  %v1589 = vadd.f32 %v1565, %v1585
  %v1590 = vadd.f32 %v1566, %v1586
  %v1591 = vadd.f32 %v1567, %v1587
  %1592 = vrot.lane.b32.xlu0 %v1393, 111
  %v1593 = vpop.permute.xlu0 %1592
  %1594 = vrot.lane.b32.xlu0 %v1397, 111
  %v1595 = vpop.permute.xlu0 %1594
  %1596 = vrot.lane.b32.xlu0 %v1401, 111
  %v1597 = vpop.permute.xlu0 %1596
  %1598 = vrot.lane.b32.xlu0 %v1405, 111
  %v1599 = vpop.permute.xlu0 %1598
  %v1600 = vsel %vm273, %v1597, %v1599
  %v1601 = vsel %vm273, %v1595, %v1597
  %v1602 = vsel %vm273, %v1593, %v1595
  %v1603 = vsel %vm273, %v1599, %v1593
  %v1604 = vld [vmem:[%s278] sm:$0xff]
  %v1605 = vld [vmem:[%s278 + $0x8] sm:$0xff]
  %v1606 = vld [vmem:[%s278 + $0x10] sm:$0xff]
  %v1607 = vld [vmem:[%s278 + $0x18] sm:$0xff]
  %v1608 = vmul.f32 %v1604, %v1602
  %v1609 = vmul.f32 %v1605, %v1601
  %v1610 = vmul.f32 %v1606, %v1600
  %v1611 = vmul.f32 %v1607, %v1603
  %v1612 = vadd.f32 %v1588, %v1608
  %v1613 = vadd.f32 %v1589, %v1609
  %v1614 = vadd.f32 %v1590, %v1610
  %v1615 = vadd.f32 %v1591, %v1611
  %v1616 = vmax.f32 %v1612, 0.0
  %v1617 = vmax.f32 %v1613, 0.0
  %v1618 = vmax.f32 %v1614, 0.0
  %v1619 = vmax.f32 %v1615, 0.0
  %v1620 = vld [vmem:[%s295] sm:$0xff]
  %v1621 = vld [vmem:[%s295 + $0x8] sm:$0xff]
  %v1622 = vld [vmem:[%s295 + $0x10] sm:$0xff]
  %v1623 = vld [vmem:[%s295 + $0x18] sm:$0xff]
  %v1624 = vmul.f32 %v1620, %v1616
  %v1625 = vmul.f32 %v1621, %v1617
  %v1626 = vmul.f32 %v1622, %v1618
  %v1627 = vmul.f32 %v1623, %v1619
  %1628 = vrot.lane.b32.xlu0 %v1616, 17
  %v1629 = vpop.permute.xlu0 %1628
  %1630 = vrot.lane.b32.xlu0 %v1617, 17
  %v1631 = vpop.permute.xlu0 %1630
  %1632 = vrot.lane.b32.xlu0 %v1618, 17
  %v1633 = vpop.permute.xlu0 %1632
  %1634 = vrot.lane.b32.xlu0 %v1619, 17
  %v1635 = vpop.permute.xlu0 %1634
  %v1636 = vsel %vm92, %v1633, %v1635
  %v1637 = vsel %vm92, %v1631, %v1633
  %v1638 = vsel %vm92, %v1629, %v1631
  %v1639 = vsel %vm92, %v1635, %v1629
  %v1640 = vld [vmem:[%s3] sm:$0xff]
  %v1641 = vld [vmem:[%s3 + $0x8] sm:$0xff]
  %v1642 = vld [vmem:[%s3 + $0x10] sm:$0xff]
  %v1643 = vld [vmem:[%s3 + $0x18] sm:$0xff]
  %v1644 = vmul.f32 %v1640, %v1639
  %v1645 = vmul.f32 %v1641, %v1638
  %v1646 = vmul.f32 %v1642, %v1637
  %v1647 = vmul.f32 %v1643, %v1636
  %v1648 = vadd.f32 %v1624, %v1644
  %v1649 = vadd.f32 %v1625, %v1645
  %v1650 = vadd.f32 %v1626, %v1646
  %v1651 = vadd.f32 %v1627, %v1647
  %1652 = vrot.lane.b32.xlu0 %v1616, 16
  %v1653 = vpop.permute.xlu0 %1652
  %1654 = vrot.lane.b32.xlu0 %v1617, 16
  %v1655 = vpop.permute.xlu0 %1654
  %1656 = vrot.lane.b32.xlu0 %v1618, 16
  %v1657 = vpop.permute.xlu0 %1656
  %1658 = vrot.lane.b32.xlu0 %v1619, 16
  %v1659 = vpop.permute.xlu0 %1658
  %v1660 = vsel %vm117, %v1657, %v1659
  %v1661 = vsel %vm117, %v1655, %v1657
  %v1662 = vsel %vm117, %v1653, %v1655
  %v1663 = vsel %vm117, %v1659, %v1653
  %v1664 = vld [vmem:[%s340] sm:$0xff]
  %v1665 = vld [vmem:[%s340 + $0x8] sm:$0xff]
  %v1666 = vld [vmem:[%s340 + $0x10] sm:$0xff]
  %v1667 = vld [vmem:[%s340 + $0x18] sm:$0xff]
  %v1668 = vmul.f32 %v1664, %v1663
  %v1669 = vmul.f32 %v1665, %v1662
  %v1670 = vmul.f32 %v1666, %v1661
  %v1671 = vmul.f32 %v1667, %v1660
  %v1672 = vadd.f32 %v1648, %v1668
  %v1673 = vadd.f32 %v1649, %v1669
  %v1674 = vadd.f32 %v1650, %v1670
  %v1675 = vadd.f32 %v1651, %v1671
  %1676 = vrot.lane.b32.xlu0 %v1616, 15
  %v1677 = vpop.permute.xlu0 %1676
  %1678 = vrot.lane.b32.xlu0 %v1617, 15
  %v1679 = vpop.permute.xlu0 %1678
  %1680 = vrot.lane.b32.xlu0 %v1618, 15
  %v1681 = vpop.permute.xlu0 %1680
  %1682 = vrot.lane.b32.xlu0 %v1619, 15
  %v1683 = vpop.permute.xlu0 %1682
  %v1684 = vsel %vm143, %v1681, %v1683
  %v1685 = vsel %vm143, %v1679, %v1681
  %v1686 = vsel %vm143, %v1677, %v1679
  %v1687 = vsel %vm143, %v1683, %v1677
  %v1688 = vld [vmem:[%s365] sm:$0xff]
  %v1689 = vld [vmem:[%s365 + $0x8] sm:$0xff]
  %v1690 = vld [vmem:[%s365 + $0x10] sm:$0xff]
  %v1691 = vld [vmem:[%s365 + $0x18] sm:$0xff]
  %v1692 = vmul.f32 %v1688, %v1687
  %v1693 = vmul.f32 %v1689, %v1686
  %v1694 = vmul.f32 %v1690, %v1685
  %v1695 = vmul.f32 %v1691, %v1684
  %v1696 = vadd.f32 %v1672, %v1692
  %v1697 = vadd.f32 %v1673, %v1693
  %v1698 = vadd.f32 %v1674, %v1694
  %v1699 = vadd.f32 %v1675, %v1695
  %1700 = vrot.lane.b32.xlu0 %v1616, 1
  %v1701 = vpop.permute.xlu0 %1700
  %1702 = vrot.lane.b32.xlu0 %v1617, 1
  %v1703 = vpop.permute.xlu0 %1702
  %1704 = vrot.lane.b32.xlu0 %v1618, 1
  %v1705 = vpop.permute.xlu0 %1704
  %1706 = vrot.lane.b32.xlu0 %v1619, 1
  %v1707 = vpop.permute.xlu0 %1706
  %v1708 = vsel %vm169, %v1705, %v1707
  %v1709 = vsel %vm169, %v1703, %v1705
  %v1710 = vsel %vm169, %v1701, %v1703
  %v1711 = vsel %vm169, %v1707, %v1701
  %v1712 = vld [vmem:[%s390] sm:$0xff]
  %v1713 = vld [vmem:[%s390 + $0x8] sm:$0xff]
  %v1714 = vld [vmem:[%s390 + $0x10] sm:$0xff]
  %v1715 = vld [vmem:[%s390 + $0x18] sm:$0xff]
  %v1716 = vmul.f32 %v1712, %v1711
  %v1717 = vmul.f32 %v1713, %v1710
  %v1718 = vmul.f32 %v1714, %v1709
  %v1719 = vmul.f32 %v1715, %v1708
  %v1720 = vadd.f32 %v1696, %v1716
  %v1721 = vadd.f32 %v1697, %v1717
  %v1722 = vadd.f32 %v1698, %v1718
  %v1723 = vadd.f32 %v1699, %v1719
  %1724 = vrot.lane.b32.xlu0 %v1616, 127
  %v1725 = vpop.permute.xlu0 %1724
  %1726 = vrot.lane.b32.xlu0 %v1617, 127
  %v1727 = vpop.permute.xlu0 %1726
  %1728 = vrot.lane.b32.xlu0 %v1618, 127
  %v1729 = vpop.permute.xlu0 %1728
  %1730 = vrot.lane.b32.xlu0 %v1619, 127
  %v1731 = vpop.permute.xlu0 %1730
  %v1732 = vsel %vm195, %v1729, %v1731
  %v1733 = vsel %vm195, %v1727, %v1729
  %v1734 = vsel %vm195, %v1725, %v1727
  %v1735 = vsel %vm195, %v1731, %v1725
  %v1736 = vld [vmem:[%s415] sm:$0xff]
  %v1737 = vld [vmem:[%s415 + $0x8] sm:$0xff]
  %v1738 = vld [vmem:[%s415 + $0x10] sm:$0xff]
  %v1739 = vld [vmem:[%s415 + $0x18] sm:$0xff]
  %v1740 = vmul.f32 %v1736, %v1734
  %v1741 = vmul.f32 %v1737, %v1733
  %v1742 = vmul.f32 %v1738, %v1732
  %v1743 = vmul.f32 %v1739, %v1735
  %v1744 = vadd.f32 %v1720, %v1740
  %v1745 = vadd.f32 %v1721, %v1741
  %v1746 = vadd.f32 %v1722, %v1742
  %v1747 = vadd.f32 %v1723, %v1743
  %1748 = vrot.lane.b32.xlu0 %v1616, 113
  %v1749 = vpop.permute.xlu0 %1748
  %1750 = vrot.lane.b32.xlu0 %v1617, 113
  %v1751 = vpop.permute.xlu0 %1750
  %1752 = vrot.lane.b32.xlu0 %v1618, 113
  %v1753 = vpop.permute.xlu0 %1752
  %1754 = vrot.lane.b32.xlu0 %v1619, 113
  %v1755 = vpop.permute.xlu0 %1754
  %v1756 = vsel %vm221, %v1753, %v1755
  %v1757 = vsel %vm221, %v1751, %v1753
  %v1758 = vsel %vm221, %v1749, %v1751
  %v1759 = vsel %vm221, %v1755, %v1749
  %v1760 = vld [vmem:[%s440] sm:$0xff]
  %v1761 = vld [vmem:[%s440 + $0x8] sm:$0xff]
  %v1762 = vld [vmem:[%s440 + $0x10] sm:$0xff]
  %v1763 = vld [vmem:[%s440 + $0x18] sm:$0xff]
  %v1764 = vmul.f32 %v1760, %v1758
  %v1765 = vmul.f32 %v1761, %v1757
  %v1766 = vmul.f32 %v1762, %v1756
  %v1767 = vmul.f32 %v1763, %v1759
  %v1768 = vadd.f32 %v1744, %v1764
  %v1769 = vadd.f32 %v1745, %v1765
  %v1770 = vadd.f32 %v1746, %v1766
  %v1771 = vadd.f32 %v1747, %v1767
  %1772 = vrot.lane.b32.xlu0 %v1616, 112
  %v1773 = vpop.permute.xlu0 %1772
  %1774 = vrot.lane.b32.xlu0 %v1617, 112
  %v1775 = vpop.permute.xlu0 %1774
  %1776 = vrot.lane.b32.xlu0 %v1618, 112
  %v1777 = vpop.permute.xlu0 %1776
  %1778 = vrot.lane.b32.xlu0 %v1619, 112
  %v1779 = vpop.permute.xlu0 %1778
  %v1780 = vsel %vm247, %v1777, %v1779
  %v1781 = vsel %vm247, %v1775, %v1777
  %v1782 = vsel %vm247, %v1773, %v1775
  %v1783 = vsel %vm247, %v1779, %v1773
  %v1784 = vld [vmem:[%s465] sm:$0xff]
  %v1785 = vld [vmem:[%s465 + $0x8] sm:$0xff]
  %v1786 = vld [vmem:[%s465 + $0x10] sm:$0xff]
  %v1787 = vld [vmem:[%s465 + $0x18] sm:$0xff]
  %v1788 = vmul.f32 %v1784, %v1782
  %v1789 = vmul.f32 %v1785, %v1781
  %v1790 = vmul.f32 %v1786, %v1780
  %v1791 = vmul.f32 %v1787, %v1783
  %v1792 = vadd.f32 %v1768, %v1788
  %v1793 = vadd.f32 %v1769, %v1789
  %v1794 = vadd.f32 %v1770, %v1790
  %v1795 = vadd.f32 %v1771, %v1791
  %1796 = vrot.lane.b32.xlu0 %v1616, 111
  %v1797 = vpop.permute.xlu0 %1796
  %1798 = vrot.lane.b32.xlu0 %v1617, 111
  %v1799 = vpop.permute.xlu0 %1798
  %1800 = vrot.lane.b32.xlu0 %v1618, 111
  %v1801 = vpop.permute.xlu0 %1800
  %1802 = vrot.lane.b32.xlu0 %v1619, 111
  %v1803 = vpop.permute.xlu0 %1802
  %v1804 = vsel %vm273, %v1801, %v1803
  %v1805 = vsel %vm273, %v1799, %v1801
  %v1806 = vsel %vm273, %v1797, %v1799
  %v1807 = vsel %vm273, %v1803, %v1797
  %v1808 = vld [vmem:[%s490] sm:$0xff]
  %v1809 = vld [vmem:[%s490 + $0x8] sm:$0xff]
  %v1810 = vld [vmem:[%s490 + $0x10] sm:$0xff]
  %v1811 = vld [vmem:[%s490 + $0x18] sm:$0xff]
  %v1812 = vmul.f32 %v1808, %v1806
  %v1813 = vmul.f32 %v1809, %v1805
  %v1814 = vmul.f32 %v1810, %v1804
  %v1815 = vmul.f32 %v1811, %v1807
  %v1816 = vadd.f32 %v1792, %v1812
  %v1817 = vadd.f32 %v1793, %v1813
  %v1818 = vadd.f32 %v1794, %v1814
  %v1819 = vadd.f32 %v1795, %v1815
  %v1820 = vrot.slane %v1816, 4
  %v1821 = vadd.f32 %v1816, %v1820
  %v1822 = vrot.slane %v1821, 2
  %v1823 = vadd.f32 %v1821, %v1822
  %v1824 = vrot.slane %v1823, 1
  %v1825 = vadd.f32 %v1823, %v1824
  %v1826 = vrot.slane %v1817, 4
  %v1827 = vadd.f32 %v1817, %v1826
  %v1828 = vrot.slane %v1827, 2
  %v1829 = vadd.f32 %v1827, %v1828
  %v1830 = vrot.slane %v1829, 1
  %v1831 = vadd.f32 %v1829, %v1830
  %v1832 = vrot.slane %v1818, 4
  %v1833 = vadd.f32 %v1818, %v1832
  %v1834 = vrot.slane %v1833, 2
  %v1835 = vadd.f32 %v1833, %v1834
  %v1836 = vrot.slane %v1835, 1
  %v1837 = vadd.f32 %v1835, %v1836
  %v1838 = vrot.slane %v1819, 4
  %v1839 = vadd.f32 %v1819, %v1838
  %v1840 = vrot.slane %v1839, 2
  %v1841 = vadd.f32 %v1839, %v1840
  %v1842 = vrot.slane %v1841, 1
  %v1843 = vadd.f32 %v1841, %v1842
  %v1844 = vadd.f32 %v1825, %v527
  %v1845 = vadd.f32 %v1831, %v527
  %v1846 = vadd.f32 %v1837, %v527
  %v1847 = vadd.f32 %v1843, %v527
  %v1852 = vcombine.low %v1844, %v1845
  %v1853 = vcombine.low %v1846, %v1847
  %v1855 = vunpack.c.l.s4 1966171168
  %v1856 = vunpack.c.0.s8 %v1855
  %v1857 = vlaneseq
  %v1858 = vshrl.u32 %v1857, 7
  %v1859 = vsub.s32 %v1856, %v1858
  %v1860 = vrot.slane %v1852, %v1859
  %v1862 = vunpack.c.l.s4 1966171168
  %v1863 = vunpack.c.0.s8 %v1862
  %v1864 = vlaneseq
  %v1865 = vshrl.u32 %v1864, 7
  %v1866 = vsub.s32 %v1863, %v1865
  %v1867 = vrot.slane %v1853, %v1866
  %v1868 = vcombine.low %v1860, %v1867
  %v1870 = vunpack.c.l.s4 1966171168
  %v1871 = vunpack.c.0.s8 %v1870
  %v1872 = vlaneseq
  %v1873 = vshrl.u32 %v1872, 7
  %v1874 = vsub.s32 %v1871, %v1873
  %v1875 = vrot.slane %v1868, %v1874
  %s1877 = scalar_lea.vmem %s6, 8
  %1878 = vst.msk [vmem:[%s1877] sm:$0xf] %vm572, %v1875
  // Predicated region
  $region26: #{nesterov_forward.1} parent=0 // pred_check
    _
  $region27: #{nesterov_forward.1} parent=0 // pred_check_branch
    %1880 = sbr.rel (0) target = $region29
  $region28: #{nesterov_forward.1} parent=0 // pred_region
    _
  $region29: #{nesterov_forward.1} parent=0 // pred_fallthru
    _
  // Predicated region
  $region30: #{nesterov_forward.1} parent=0 // pred_check
    _
  $region31: #{nesterov_forward.1} parent=0 // pred_check_branch
    %1882 = sbr.rel (0) target = $region33
  $region32: #{nesterov_forward.1} parent=0 // pred_region
    _
  $region33: #{nesterov_forward.1} parent=0 // pred_fallthru
    _

</llo_original>
